<compile_context>
chip_gen: v6e
topology: v6e:2x2x1
jax: 0.10.0
libtpu: 0.0.40
codegen_flags: <defaults>
</compile_context>

<pallas_src>
import jax
import jax.numpy as jnp
import numpy as np
from jax import lax
from jax.experimental import pallas as pl
from jax.experimental.pallas import tpu as pltpu

_HIGHEST = lax.Precision.HIGHEST  # full-f32 MXU passes; keeps the 1.0/0.0
                                  # selection copy exact to ~1 ulp.


def _encoder_kernel(x_ref, w1_ref, b1_ref, w2_ref, b2_ref, wsel_ref, w3_ref,
                    b3_ref, o_ref):
    """One batch tile in natural (batch-on-sublanes) layout.

    x_ref    : (tb, nx)
    w1_ref   : (nx, H)   layer-1 weight^T, zero rows at control positions
    b1_ref   : (1, H)
    w2_ref   : (H, H)    layer-2 weight^T;   b2_ref: (1, H)
    wsel_ref : (nx, P)   1.0 at (control_positions[m], m), else 0.0
    w3_ref   : (H, P)    layer-3 weight^T in columns [M:P), zeros in [0:M)
    b3_ref   : (1, P)    zeros in [0:M), layer-3 bias in [M:P)
    o_ref    : (tb, P)
    """
    x = x_ref[...]

    h = jnp.dot(x, w1_ref[...], precision=_HIGHEST,
                preferred_element_type=jnp.float32) + b1_ref[...]
    h = jnp.maximum(h, 0.0)
    h = jnp.dot(h, w2_ref[...], precision=_HIGHEST,
                preferred_element_type=jnp.float32) + b2_ref[...]
    h = jnp.maximum(h, 0.0)

    # Final layer fused with the control-position copy:
    #   y[:, :M] = x @ wsel  (exact selection)  + 0          + 0
    #   y[:, M:] = 0                            + h @ w3^T   + b3
    o_ref[...] = (jnp.dot(x, wsel_ref[...], precision=_HIGHEST,
                          preferred_element_type=jnp.float32)
                  + jnp.dot(h, w3_ref[...], precision=_HIGHEST,
                            preferred_element_type=jnp.float32)
                  + b3_ref[...])


def prepare_params(params, nx, M, P, control_positions):
    """Torch-layout params -> kernel-ready tensors (gather/copy folded in)."""
    w1, b1, w2, b2, w3, b3 = params          # weights (out, in), biases (out,)
    cp = np.asarray(control_positions, dtype=np.int64)
    mask = np.ones(nx, dtype=bool)
    mask[cp] = False
    non_control = np.nonzero(mask)[0]
    hidden = w1.shape[0]

    # Layer-1 weight^T with zero rows at control positions: kernel consumes
    # the full x, no non-control gather needed.
    w1t = np.zeros((nx, hidden), np.float32)
    w1t[non_control, :] = np.asarray(w1).T

    # Selection matrix for the control copy (exact 1.0/0.0 rows).
    wsel = np.zeros((nx, P), np.float32)
    wsel[cp, np.arange(M)] = 1.0

    # Layer-3 weight^T / bias zero-padded in the copy slots.
    w3t = np.zeros((hidden, P), np.float32)
    w3t[:, M:] = np.asarray(w3).T
    b3p = np.zeros((1, P), np.float32)
    b3p[0, M:] = np.asarray(b3)

    return (jnp.asarray(w1t),
            jnp.asarray(b1, jnp.float32).reshape(1, -1),
            jnp.asarray(w2, jnp.float32).T,
            jnp.asarray(b2, jnp.float32).reshape(1, -1),
            jnp.asarray(wsel),
            jnp.asarray(w3t),
            jnp.asarray(b3p))


def _round_up(x, m):
    return ((x + m - 1) // m) * m


def _choose_batch_block(B, block_b):
    """Single grid step for small B; >= 2 'parallel' tiles for large B so the
    grid shards across both TensorCores on v7x.  The cap (default 4096) keeps
    the lane-padded per-step VMEM footprint ~13 MiB, comfortably inside the
    explicit 32 MiB scoped-VMEM limit on every generation (v5e/v6e/v7x)."""
    if B <= 1024:
        return B                        # one step, block == full array extent
    return min(_round_up(block_b, 512), _round_up(pl.cdiv(B, 2), 512))


def encoder_forward(x, kernel_params, *, block_b=4096):
    """Encoder.forward.  x: (B, nx) f32 -> y: (B, P) f32."""
    w1t, b1, w2t, b2, wsel, w3t, b3 = kernel_params
    nx, hidden = w1t.shape
    P = b3.shape[1]
    B = x.shape[0]
    tb = _choose_batch_block(B, block_b)

    res = lambda i: (0, 0)              # weights stay VMEM-resident across grid
    return pl.pallas_call(
        _encoder_kernel,
        out_shape=jax.ShapeDtypeStruct((B, P), jnp.float32),
        grid=(pl.cdiv(B, tb),),
        in_specs=[
            pl.BlockSpec((tb, nx), lambda i: (i, 0)),     # x batch tiles
            pl.BlockSpec((nx, hidden), res),
            pl.BlockSpec((1, hidden), res),
            pl.BlockSpec((hidden, hidden), res),
            pl.BlockSpec((1, hidden), res),
            pl.BlockSpec((nx, P), res),
            pl.BlockSpec((hidden, P), res),
            pl.BlockSpec((1, P), res),
        ],
        out_specs=pl.BlockSpec((tb, P), lambda i: (i, 0)),  # y batch tiles
        compiler_params=pltpu.CompilerParams(
            dimension_semantics=("parallel",),
            vmem_limit_bytes=32 * 1024 * 1024),
    )(x, w1t, b1, w2t, b2, wsel, w3t, b3)


def init_params(key, nx, M, hidden_dim, P):
    """Deterministic synthetic init matching nn.Linear (torch (out,in) layout)."""
    ks = jax.random.split(key, 6)

    def lin(kw, kb, out_d, in_d):
        bound = 1.0 / np.sqrt(in_d)
        w = jax.random.uniform(kw, (out_d, in_d), jnp.float32, -bound, bound)
        b = jax.random.uniform(kb, (out_d,), jnp.float32, -bound, bound)
        return w, b

    w1, b1 = lin(ks[0], ks[1], hidden_dim, nx - M)
    w2, b2 = lin(ks[2], ks[3], hidden_dim, hidden_dim)
    w3, b3 = lin(ks[4], ks[5], P - M, hidden_dim)
    return (w1, b1, w2, b2, w3, b3)


def reference_forward(x, params, nx, M, P, control_positions):
    """Pure-JAX reference mirroring the PyTorch forward (f32 math)."""
    w1, b1, w2, b2, w3, b3 = params
    cp = np.asarray(control_positions)
    mask = np.ones(nx, dtype=bool)
    mask[cp] = False
    x_nc = x[:, np.nonzero(mask)[0]]
    h1 = jnp.maximum(jnp.dot(x_nc, w1.T, precision=_HIGHEST) + b1, 0.0)
    h2 = jnp.maximum(jnp.dot(h1, w2.T, precision=_HIGHEST) + b2, 0.0)
    y_nc = jnp.dot(h2, w3.T, precision=_HIGHEST) + b3
    return jnp.concatenate([x[:, cp], y_nc], axis=1)


if __name__ == "__main__":
    nx, M, hidden_dim, P = 16, 4, 32, 12
    control_positions = [0, 5, 10, 15]

    key = jax.random.PRNGKey(0)
    kp, kx1, kx2, kx3 = jax.random.split(key, 4)
    params = init_params(kp, nx, M, hidden_dim, P)
    kparams = prepare_params(params, nx, M, P, control_positions)
    cp = np.asarray(control_positions)

    cases = (
        ("small", kx1, 8),        # single block, block == full extent
        ("medium", kx2, 1000),    # single block, non-multiple-of-128 batch
        ("multi_tile", kx3, 2050) # grid=(2,), ragged last block, parallel axis
    )
    for name, kx, B in cases:
        x = jax.random.normal(kx, (B, nx), jnp.float32)
        y = jax.block_until_ready(encoder_forward(x, kparams))
        assert y.shape == (B, P), (name, y.shape)

        y_ref = reference_forward(x, params, nx, M, P, control_positions)
        np.testing.assert_allclose(np.asarray(y), np.asarray(y_ref),
                                   rtol=1e-5, atol=1e-5)
        # Control columns are a (near-)verbatim copy of the input columns.
        np.testing.assert_allclose(np.asarray(y[:, :M]), np.asarray(x[:, cp]),
                                   rtol=1e-6, atol=1e-6)

    print("KERNEL_OK")
</pallas_src>

<mosaic_0001>
module attributes {stable_mosaic.version = 11 : i64} {
  func.func @_encoder_kernel(%arg0: i32, %arg1: memref<8x16xf32, #tpu.memory_space<vmem>>, %arg2: memref<16x32xf32, #tpu.memory_space<vmem>>, %arg3: memref<1x32xf32, #tpu.memory_space<vmem>>, %arg4: memref<32x32xf32, #tpu.memory_space<vmem>>, %arg5: memref<1x32xf32, #tpu.memory_space<vmem>>, %arg6: memref<16x12xf32, #tpu.memory_space<vmem>>, %arg7: memref<32x12xf32, #tpu.memory_space<vmem>>, %arg8: memref<1x12xf32, #tpu.memory_space<vmem>>, %arg9: memref<8x12xf32, #tpu.memory_space<vmem>>) attributes {dimension_semantics = [#tpu.dimension_semantics<parallel>], iteration_bounds = array<i64: 1>, scalar_prefetch = 0 : i64, scratch_operands = 0 : i64, tpu.core_type = #tpu.core_type<tc>, window_params = [{transform_indices = @transform_0, window_bounds = array<i64: 8, 16>}, {pipeline_mode = #tpu.pipeline_mode<synchronous>, transform_indices = @transform_1, window_bounds = array<i64: 16, 32>}, {pipeline_mode = #tpu.pipeline_mode<synchronous>, transform_indices = @transform_2, window_bounds = array<i64: 1, 32>}, {pipeline_mode = #tpu.pipeline_mode<synchronous>, transform_indices = @transform_3, window_bounds = array<i64: 32, 32>}, {pipeline_mode = #tpu.pipeline_mode<synchronous>, transform_indices = @transform_4, window_bounds = array<i64: 1, 32>}, {pipeline_mode = #tpu.pipeline_mode<synchronous>, transform_indices = @transform_5, window_bounds = array<i64: 16, 12>}, {pipeline_mode = #tpu.pipeline_mode<synchronous>, transform_indices = @transform_6, window_bounds = array<i64: 32, 12>}, {pipeline_mode = #tpu.pipeline_mode<synchronous>, transform_indices = @transform_7, window_bounds = array<i64: 1, 12>}, {transform_indices = @transform_8, window_bounds = array<i64: 8, 12>}]} {
    %c0 = arith.constant 0 : index
    %c0_0 = arith.constant 0 : index
    %0 = vector.load %arg1[%c0, %c0_0] : memref<8x16xf32, #tpu.memory_space<vmem>>, vector<8x16xf32>
    %c0_1 = arith.constant 0 : index
    %c0_2 = arith.constant 0 : index
    %1 = vector.load %arg2[%c0_1, %c0_2] : memref<16x32xf32, #tpu.memory_space<vmem>>, vector<16x32xf32>
    %cst = arith.constant dense<0.000000e+00> : vector<8x32xf32>
    %2 = tpu.matmul %0, %1, %cst {dimension_numbers = #tpu.dot_dimension_numbers<[1], [0], [0], [1], [0, 0, 1, 1], [], []>, precision = #tpu.contract_precision<fp32>} : vector<8x16xf32>, vector<16x32xf32>, vector<8x32xf32> -> vector<8x32xf32>
    %c0_3 = arith.constant 0 : index
    %c0_4 = arith.constant 0 : index
    %3 = vector.load %arg3[%c0_3, %c0_4] : memref<1x32xf32, #tpu.memory_space<vmem>>, vector<1x32xf32>
    %4 = vector.broadcast %3 : vector<1x32xf32> to vector<8x32xf32>
    %5 = arith.addf %2, %4 : vector<8x32xf32>
    %cst_5 = arith.constant 0.000000e+00 : f32
    %6 = vector.broadcast %cst_5 : f32 to vector<8x32xf32>
    %7 = arith.maximumf %5, %6 : vector<8x32xf32>
    %c0_6 = arith.constant 0 : index
    %c0_7 = arith.constant 0 : index
    %8 = vector.load %arg4[%c0_6, %c0_7] : memref<32x32xf32, #tpu.memory_space<vmem>>, vector<32x32xf32>
    %cst_8 = arith.constant dense<0.000000e+00> : vector<8x32xf32>
    %9 = tpu.matmul %7, %8, %cst_8 {dimension_numbers = #tpu.dot_dimension_numbers<[1], [0], [0], [1], [0, 0, 1, 1], [], []>, precision = #tpu.contract_precision<fp32>} : vector<8x32xf32>, vector<32x32xf32>, vector<8x32xf32> -> vector<8x32xf32>
    %c0_9 = arith.constant 0 : index
    %c0_10 = arith.constant 0 : index
    %10 = vector.load %arg5[%c0_9, %c0_10] : memref<1x32xf32, #tpu.memory_space<vmem>>, vector<1x32xf32>
    %11 = vector.broadcast %10 : vector<1x32xf32> to vector<8x32xf32>
    %12 = arith.addf %9, %11 : vector<8x32xf32>
    %cst_11 = arith.constant 0.000000e+00 : f32
    %13 = vector.broadcast %cst_11 : f32 to vector<8x32xf32>
    %14 = arith.maximumf %12, %13 : vector<8x32xf32>
    %c0_12 = arith.constant 0 : index
    %c0_13 = arith.constant 0 : index
    %15 = vector.load %arg6[%c0_12, %c0_13] : memref<16x12xf32, #tpu.memory_space<vmem>>, vector<16x12xf32>
    %cst_14 = arith.constant dense<0.000000e+00> : vector<8x12xf32>
    %16 = tpu.matmul %0, %15, %cst_14 {dimension_numbers = #tpu.dot_dimension_numbers<[1], [0], [0], [1], [0, 0, 1, 1], [], []>, precision = #tpu.contract_precision<fp32>} : vector<8x16xf32>, vector<16x12xf32>, vector<8x12xf32> -> vector<8x12xf32>
    %c0_15 = arith.constant 0 : index
    %c0_16 = arith.constant 0 : index
    %17 = vector.load %arg7[%c0_15, %c0_16] : memref<32x12xf32, #tpu.memory_space<vmem>>, vector<32x12xf32>
    %cst_17 = arith.constant dense<0.000000e+00> : vector<8x12xf32>
    %18 = tpu.matmul %14, %17, %cst_17 {dimension_numbers = #tpu.dot_dimension_numbers<[1], [0], [0], [1], [0, 0, 1, 1], [], []>, precision = #tpu.contract_precision<fp32>} : vector<8x32xf32>, vector<32x12xf32>, vector<8x12xf32> -> vector<8x12xf32>
    %19 = arith.addf %16, %18 : vector<8x12xf32>
    %c0_18 = arith.constant 0 : index
    %c0_19 = arith.constant 0 : index
    %20 = vector.load %arg8[%c0_18, %c0_19] : memref<1x12xf32, #tpu.memory_space<vmem>>, vector<1x12xf32>
    %21 = vector.broadcast %20 : vector<1x12xf32> to vector<8x12xf32>
    %22 = arith.addf %19, %21 : vector<8x12xf32>
    %c0_20 = arith.constant 0 : index
    %c0_21 = arith.constant 0 : index
    %23 = vector.load %arg9[%c0_20, %c0_21] : memref<8x12xf32, #tpu.memory_space<vmem>>, vector<8x12xf32>
    tpu.vector_store %arg9[%c0_20, %c0_21], %22 {strides = array<i32>} : memref<8x12xf32, #tpu.memory_space<vmem>>, vector<8x12xf32>,
    return
  }
  func.func @transform_0(%arg0: i32) -> (i32, i32) {
    %c0_i32 = arith.constant 0 : i32
    %c0_i32_0 = arith.constant 0 : i32
    return %arg0, %c0_i32 : i32, i32
  }
  func.func @transform_1(%arg0: i32) -> (i32, i32) {
    %c0_i32 = arith.constant 0 : i32
    %c0_i32_0 = arith.constant 0 : i32
    %c0_i32_1 = arith.constant 0 : i32
    return %c0_i32, %c0_i32_0 : i32, i32
  }
  func.func @transform_2(%arg0: i32) -> (i32, i32) {
    %c0_i32 = arith.constant 0 : i32
    %c0_i32_0 = arith.constant 0 : i32
    %c0_i32_1 = arith.constant 0 : i32
    return %c0_i32, %c0_i32_0 : i32, i32
  }
  func.func @transform_3(%arg0: i32) -> (i32, i32) {
    %c0_i32 = arith.constant 0 : i32
    %c0_i32_0 = arith.constant 0 : i32
    %c0_i32_1 = arith.constant 0 : i32
    return %c0_i32, %c0_i32_0 : i32, i32
  }
  func.func @transform_4(%arg0: i32) -> (i32, i32) {
    %c0_i32 = arith.constant 0 : i32
    %c0_i32_0 = arith.constant 0 : i32
    %c0_i32_1 = arith.constant 0 : i32
    return %c0_i32, %c0_i32_0 : i32, i32
  }
  func.func @transform_5(%arg0: i32) -> (i32, i32) {
    %c0_i32 = arith.constant 0 : i32
    %c0_i32_0 = arith.constant 0 : i32
    %c0_i32_1 = arith.constant 0 : i32
    return %c0_i32, %c0_i32_0 : i32, i32
  }
  func.func @transform_6(%arg0: i32) -> (i32, i32) {
    %c0_i32 = arith.constant 0 : i32
    %c0_i32_0 = arith.constant 0 : i32
    %c0_i32_1 = arith.constant 0 : i32
    return %c0_i32, %c0_i32_0 : i32, i32
  }
  func.func @transform_7(%arg0: i32) -> (i32, i32) {
    %c0_i32 = arith.constant 0 : i32
    %c0_i32_0 = arith.constant 0 : i32
    %c0_i32_1 = arith.constant 0 : i32
    return %c0_i32, %c0_i32_0 : i32, i32
  }
  func.func @transform_8(%arg0: i32) -> (i32, i32) {
    %c0_i32 = arith.constant 0 : i32
    %c0_i32_0 = arith.constant 0 : i32
    return %arg0, %c0_i32 : i32, i32
  }
}

</mosaic_0001>

<llo_original>
// kernel: tpu_custom_call.1
$region0: #{tpu_custom_call.1}
  #allocation0 [shape = 'u32[]', space=smem, size = 0x4, offset = 0x4, fixed_abs, tag = 'smem constant byte address 0x4 - core index']
  #allocation1 [shape = 'u32[144,128]{1,0:T(1,128)}', space=vmem, size = 0x12000, scoped, tag = 'internal scratch']
  %s0 = inlined_call_operand.hbm [shape: f32[8,16], index: 0, kind: input, shape index: {}]
  %s1 = inlined_call_operand.vmem [shape: f32[16,32], index: 1, kind: input, shape index: {}]
  %s2 = inlined_call_operand.vmem [shape: f32[1,32], index: 2, kind: input, shape index: {}]
  %s3 = inlined_call_operand.vmem [shape: f32[32,32], index: 3, kind: input, shape index: {}]
  %s4 = inlined_call_operand.vmem [shape: f32[1,32], index: 4, kind: input, shape index: {}]
  %s5 = inlined_call_operand.hbm [shape: f32[16,12], index: 5, kind: input, shape index: {}]
  %s6 = inlined_call_operand.vmem [shape: f32[32,12], index: 6, kind: input, shape index: {}]
  %s7 = inlined_call_operand.vmem [shape: f32[1,12], index: 7, kind: input, shape index: {}]
  %s8 = inlined_call_operand.hbm [shape: f32[8,12], index: 8, kind: output, shape index: {}]
  %s9 = sld [smem:[#allocation0]]
  $region50: #{tpu_custom_call.1} parent=0
    _
  %s11 = ssub.s32 1, %s9
  %s12 = scalar_select 0, %s11, %s9
  $region1: #{tpu_custom_call.1} parent=0
    #allocation2 [shape = 'u8[4096]{0}', space=vmem, size = 0x1000, scoped, tag = 'input window, operand 0, single buffered']
    #allocation3 [shape = 's32[1]{0}', space=sflag, size = 0x4, scoped, tag = 'scoped memory for tpu_custom_call.1']
    #allocation4 [shape = 's32[1]{0}', space=sflag, size = 0x4, scoped, tag = 'scoped memory for tpu_custom_call.1']
    #allocation5 [shape = 'u8[8192]{0}', space=vmem, size = 0x2000, scoped, tag = 'input window, operand 5, single buffered']
    #allocation6 [shape = 's32[1]{0}', space=sflag, size = 0x4, scoped, tag = 'scoped memory for tpu_custom_call.1']
    #allocation7 [shape = 'u8[4096]{0}', space=vmem, size = 0x1000, scoped, tag = 'output window, operand 0, single buffered']
    %13 = vsyncpa [#allocation3], 0
    %14 = vsyncpa [#allocation6], 0
    %15 = vsyncpa [#allocation4], 0
    // Predicated region
    $region2: #{tpu_custom_call.1} parent=1 // pred_check
      _
    $region3: #{tpu_custom_call.1} parent=1 // pred_check_branch
      %17 = sbr.rel (0) target = $region5
    $region4: #{tpu_custom_call.1} parent=1 // pred_region
      %s19 = ssub.s32 128, 128
      %20 = vsyncadd [#allocation3], %s19
      %s22 = sshll.u32 [#allocation2], 4
      %s23 = int_to_ptr.vmem [resolvable:$true] %s22
      %25 = dma.hbm_to_vmem [thread:$0]  %s0, 128, %s23, [#allocation3]
    $region5: #{tpu_custom_call.1} parent=1 // pred_fallthru
      _
    // Predicated region
    $region6: #{tpu_custom_call.1} parent=1 // pred_check
      _
    $region7: #{tpu_custom_call.1} parent=1 // pred_check_branch
      %27 = sbr.rel (0) target = $region9
    $region8: #{tpu_custom_call.1} parent=1 // pred_region
      _
    $region9: #{tpu_custom_call.1} parent=1 // pred_fallthru
      _
    // Predicated region
    $region10: #{tpu_custom_call.1} parent=1 // pred_check
      _
    $region11: #{tpu_custom_call.1} parent=1 // pred_check_branch
      %29 = sbr.rel (0) target = $region13
    $region12: #{tpu_custom_call.1} parent=1 // pred_region
      _
    $region13: #{tpu_custom_call.1} parent=1 // pred_fallthru
      _
    // Predicated region
    $region14: #{tpu_custom_call.1} parent=1 // pred_check
      _
    $region15: #{tpu_custom_call.1} parent=1 // pred_check_branch
      %31 = sbr.rel (0) target = $region17
    $region16: #{tpu_custom_call.1} parent=1 // pred_region
      _
    $region17: #{tpu_custom_call.1} parent=1 // pred_fallthru
      _
    // Predicated region
    $region18: #{tpu_custom_call.1} parent=1 // pred_check
      _
    $region19: #{tpu_custom_call.1} parent=1 // pred_check_branch
      %33 = sbr.rel (0) target = $region21
    $region20: #{tpu_custom_call.1} parent=1 // pred_region
      _
    $region21: #{tpu_custom_call.1} parent=1 // pred_fallthru
      _
    // Predicated region
    $region22: #{tpu_custom_call.1} parent=1 // pred_check
      _
    $region23: #{tpu_custom_call.1} parent=1 // pred_check_branch
      %35 = sbr.rel (0) target = $region25
    $region24: #{tpu_custom_call.1} parent=1 // pred_region
      %s37 = ssub.s32 256, 256
      %38 = vsyncadd [#allocation6], %s37
      %s39 = sshll.u32 [#allocation5], 4
      %s40 = int_to_ptr.vmem [resolvable:$true] %s39
      %45 = dma.hbm_to_vmem [thread:$0]  %s5, 256, %s40, [#allocation6], 128, 128, 8
    $region25: #{tpu_custom_call.1} parent=1 // pred_fallthru
      _
    // Predicated region
    $region26: #{tpu_custom_call.1} parent=1 // pred_check
      _
    $region27: #{tpu_custom_call.1} parent=1 // pred_check_branch
      %47 = sbr.rel (0) target = $region29
    $region28: #{tpu_custom_call.1} parent=1 // pred_region
      _
    $region29: #{tpu_custom_call.1} parent=1 // pred_fallthru
      _
    // Predicated region
    $region30: #{tpu_custom_call.1} parent=1 // pred_check
      _
    $region31: #{tpu_custom_call.1} parent=1 // pred_check_branch
      %49 = sbr.rel (0) target = $region33
    $region32: #{tpu_custom_call.1} parent=1 // pred_region
      _
    $region33: #{tpu_custom_call.1} parent=1 // pred_fallthru
      _
    // Predicated region
    $region34: #{tpu_custom_call.1} parent=1 // pred_check
      _
    $region35: #{tpu_custom_call.1} parent=1 // pred_check_branch
      %51 = sbr.rel (0) target = $region37
    $region36: #{tpu_custom_call.1} parent=1 // pred_region
      %52 = dma.done [#allocation3], 128
    $region37: #{tpu_custom_call.1} parent=1 // pred_fallthru
      _
    // Predicated region
    $region38: #{tpu_custom_call.1} parent=1 // pred_check
      _
    $region39: #{tpu_custom_call.1} parent=1 // pred_check_branch
      %54 = sbr.rel (0) target = $region41
    $region40: #{tpu_custom_call.1} parent=1 // pred_region
      %55 = dma.done [#allocation6], 256
    $region41: #{tpu_custom_call.1} parent=1 // pred_fallthru
      _
    %v56 = vld [vmem:[#allocation2] sm:$0xff]
    %v57 = vld [vmem:[%s1] sm:$0xff]
    %v58 = vld [vmem:[%s1 + $0x8] sm:$0xff]
    %v59 = vld [vmem:[%s2] sm:$0x1]
    %v61 = vlaneseq
    %v62 = vshrl.u32 %v61, 7
    %v63 = vsub.s32 0, %v62
    %v64 = vrot.slane %v59, %v63
    %vm66 = vcmask 130048
    %v68 = vsel %vm66, %v56, 0
    %70 = vmatprep.subr.mxu0 0.0
    %71 = vmatpush1.msra.mxu0 0.0
    %72 = vmatprep.subr.mxu0 0.0
    %73 = vmatpush1.msra.mxu0 0.0
    %74 = vmatprep.subr.mxu0 0.0
    %75 = vmatpush1.msra.mxu0 0.0
    %76 = vmatprep.subr.mxu0 0.0
    %77 = vmatpush1.msra.mxu0 0.0
    %78 = vmatprep.subr.mxu0 0.0
    %79 = vmatpush1.msra.mxu0 0.0
    %80 = vmatprep.subr.mxu0 0.0
    %81 = vmatpush1.msra.mxu0 0.0
    %82 = vmatprep.subr.mxu0 0.0
    %83 = vmatpush1.msra.mxu0 0.0
    %84 = vmatprep.subr.mxu0 0.0
    %85 = vmatpush1.msra.mxu0 0.0
    %86 = vmatprep.subr.mxu0 0.0
    %87 = vmatpush1.msra.mxu0 0.0
    %88 = vmatprep.subr.mxu0 0.0
    %89 = vmatpush1.msra.mxu0 0.0
    %90 = vmatprep.subr.mxu0 0.0
    %91 = vmatpush1.msra.mxu0 0.0
    %92 = vmatprep.subr.mxu0 0.0
    %93 = vmatpush1.msra.mxu0 0.0
    %94 = vmatprep.subr.mxu0 0.0
    %95 = vmatpush1.msra.mxu0 0.0
    %96 = vmatprep.subr.mxu0 0.0
    %97 = vmatpush1.msra.mxu0 0.0
    %98 = vmatprep.subr.mxu0 0.0
    %v99 = vand.u32 %v58, 4294901760
    %100 = vmatpush1.msra.mxu0 %v99
    %101 = vmatprep.subr.mxu0 0.0
    %v102 = vand.u32 %v57, 4294901760
    %103 = vmatpush1.msra.mxu0 %v102
    %104 = vmatprep.subr.mxu0 0.0
    %105 = vmatpush2.msra.mxu0 0.0
    %106 = vmatprep.subr.mxu0 0.0
    %107 = vmatpush2.msra.mxu0 0.0
    %108 = vmatprep.subr.mxu0 0.0
    %109 = vmatpush2.msra.mxu0 0.0
    %110 = vmatprep.subr.mxu0 0.0
    %111 = vmatpush2.msra.mxu0 0.0
    %112 = vmatprep.subr.mxu0 0.0
    %113 = vmatpush2.msra.mxu0 0.0
    %114 = vmatprep.subr.mxu0 0.0
    %115 = vmatpush2.msra.mxu0 0.0
    %116 = vmatprep.subr.mxu0 0.0
    %117 = vmatpush2.msra.mxu0 0.0
    %118 = vmatprep.subr.mxu0 0.0
    %119 = vmatpush2.msra.mxu0 0.0
    %120 = vmatprep.subr.mxu0 0.0
    %121 = vmatpush2.msra.mxu0 0.0
    %122 = vmatprep.subr.mxu0 0.0
    %123 = vmatpush2.msra.mxu0 0.0
    %124 = vmatprep.subr.mxu0 0.0
    %125 = vmatpush2.msra.mxu0 0.0
    %126 = vmatprep.subr.mxu0 0.0
    %127 = vmatpush2.msra.mxu0 0.0
    %128 = vmatprep.subr.mxu0 0.0
    %129 = vmatpush2.msra.mxu0 0.0
    %130 = vmatprep.subr.mxu0 0.0
    %131 = vmatpush2.msra.mxu0 0.0
    %132 = vmatprep.subr.mxu0 0.0
    %133 = vmatpush2.msra.mxu0 0.0
    %134 = vmatprep.subr.mxu0 0.0
    %135 = vmatpush2.msra.mxu0 0.0
    %136 = vmatprep.mubr.f32.mxu0 0.0
    %v137 = vand.u32 %v68, 4294901760
    %v138 = vsub.f32 %v68, %v137
    %v139 = vand.u32 %v138, 4294901760
    %v140 = vsub.f32 %v138, %v139
    %v141 = vand.u32 %v140, 4294901760
    %142 = vmatmul.mubr.f32.gmra.mxu0 %v141
    %v143 = vpop.f32.mrf.mxu0
    %v144 = vadd.f32 %v64, %v143
    %v145 = vpop.f32.mrf.mxu0
    %146 = vdwg.mxu0
    %147 = vmatprep.subr.mxu0 0.0
    %148 = vmatpush1.msra.mxu0 0.0
    %149 = vmatprep.subr.mxu0 0.0
    %150 = vmatpush1.msra.mxu0 0.0
    %151 = vmatprep.subr.mxu0 0.0
    %152 = vmatpush1.msra.mxu0 0.0
    %153 = vmatprep.subr.mxu0 0.0
    %154 = vmatpush1.msra.mxu0 0.0
    %155 = vmatprep.subr.mxu0 0.0
    %156 = vmatpush1.msra.mxu0 0.0
    %157 = vmatprep.subr.mxu0 0.0
    %158 = vmatpush1.msra.mxu0 0.0
    %159 = vmatprep.subr.mxu0 0.0
    %160 = vmatpush1.msra.mxu0 0.0
    %161 = vmatprep.subr.mxu0 0.0
    %162 = vmatpush1.msra.mxu0 0.0
    %163 = vmatprep.subr.mxu0 0.0
    %164 = vmatpush1.msra.mxu0 0.0
    %165 = vmatprep.subr.mxu0 0.0
    %166 = vmatpush1.msra.mxu0 0.0
    %167 = vmatprep.subr.mxu0 0.0
    %168 = vmatpush1.msra.mxu0 0.0
    %169 = vmatprep.subr.mxu0 0.0
    %170 = vmatpush1.msra.mxu0 0.0
    %171 = vmatprep.subr.mxu0 0.0
    %172 = vmatpush1.msra.mxu0 0.0
    %173 = vmatprep.subr.mxu0 0.0
    %174 = vmatpush1.msra.mxu0 0.0
    %175 = vmatprep.subr.mxu0 0.0
    %v176 = vand.u32 %v58, 4294901760
    %v177 = vsub.f32 %v58, %v176
    %v178 = vand.u32 %v177, 4294901760
    %v179 = vsub.f32 %v177, %v178
    %v180 = vand.u32 %v179, 4294901760
    %181 = vmatpush1.msra.mxu0 %v180
    %182 = vmatprep.subr.mxu0 0.0
    %v183 = vand.u32 %v57, 4294901760
    %v184 = vsub.f32 %v57, %v183
    %v185 = vand.u32 %v184, 4294901760
    %v186 = vsub.f32 %v184, %v185
    %v187 = vand.u32 %v186, 4294901760
    %188 = vmatpush1.msra.mxu0 %v187
    %189 = vmatprep.subr.mxu0 0.0
    %190 = vmatpush2.msra.mxu0 0.0
    %191 = vmatprep.subr.mxu0 0.0
    %192 = vmatpush2.msra.mxu0 0.0
    %193 = vmatprep.subr.mxu0 0.0
    %194 = vmatpush2.msra.mxu0 0.0
    %195 = vmatprep.subr.mxu0 0.0
    %196 = vmatpush2.msra.mxu0 0.0
    %197 = vmatprep.subr.mxu0 0.0
    %198 = vmatpush2.msra.mxu0 0.0
    %199 = vmatprep.subr.mxu0 0.0
    %200 = vmatpush2.msra.mxu0 0.0
    %201 = vmatprep.subr.mxu0 0.0
    %202 = vmatpush2.msra.mxu0 0.0
    %203 = vmatprep.subr.mxu0 0.0
    %204 = vmatpush2.msra.mxu0 0.0
    %205 = vmatprep.subr.mxu0 0.0
    %206 = vmatpush2.msra.mxu0 0.0
    %207 = vmatprep.subr.mxu0 0.0
    %208 = vmatpush2.msra.mxu0 0.0
    %209 = vmatprep.subr.mxu0 0.0
    %210 = vmatpush2.msra.mxu0 0.0
    %211 = vmatprep.subr.mxu0 0.0
    %212 = vmatpush2.msra.mxu0 0.0
    %213 = vmatprep.subr.mxu0 0.0
    %214 = vmatpush2.msra.mxu0 0.0
    %215 = vmatprep.subr.mxu0 0.0
    %216 = vmatpush2.msra.mxu0 0.0
    %217 = vmatprep.subr.mxu0 0.0
    %218 = vmatpush2.msra.mxu0 0.0
    %219 = vmatprep.subr.mxu0 0.0
    %220 = vmatpush2.msra.mxu0 0.0
    %221 = vmatprep.mubr.f32.mxu0 0.0
    %v222 = vand.u32 %v68, 4294901760
    %223 = vmatmul.mubr.f32.gmra.mxu0 %v222
    %v224 = vpop.f32.mrf.mxu0
    %v225 = vadd.f32 %v144, %v224
    %v226 = vpop.f32.mrf.mxu0
    %227 = vdwg.mxu0
    %228 = vmatprep.subr.mxu0 0.0
    %229 = vmatpush1.msra.mxu0 0.0
    %230 = vmatprep.subr.mxu0 0.0
    %231 = vmatpush1.msra.mxu0 0.0
    %232 = vmatprep.subr.mxu0 0.0
    %233 = vmatpush1.msra.mxu0 0.0
    %234 = vmatprep.subr.mxu0 0.0
    %235 = vmatpush1.msra.mxu0 0.0
    %236 = vmatprep.subr.mxu0 0.0
    %237 = vmatpush1.msra.mxu0 0.0
    %238 = vmatprep.subr.mxu0 0.0
    %239 = vmatpush1.msra.mxu0 0.0
    %240 = vmatprep.subr.mxu0 0.0
    %241 = vmatpush1.msra.mxu0 0.0
    %242 = vmatprep.subr.mxu0 0.0
    %243 = vmatpush1.msra.mxu0 0.0
    %244 = vmatprep.subr.mxu0 0.0
    %245 = vmatpush1.msra.mxu0 0.0
    %246 = vmatprep.subr.mxu0 0.0
    %247 = vmatpush1.msra.mxu0 0.0
    %248 = vmatprep.subr.mxu0 0.0
    %249 = vmatpush1.msra.mxu0 0.0
    %250 = vmatprep.subr.mxu0 0.0
    %251 = vmatpush1.msra.mxu0 0.0
    %252 = vmatprep.subr.mxu0 0.0
    %253 = vmatpush1.msra.mxu0 0.0
    %254 = vmatprep.subr.mxu0 0.0
    %255 = vmatpush1.msra.mxu0 0.0
    %256 = vmatprep.subr.mxu0 0.0
    %v257 = vand.u32 %v58, 4294901760
    %v258 = vsub.f32 %v58, %v257
    %259 = vmatpush1.msra.mxu0 %v258
    %260 = vmatprep.subr.mxu0 0.0
    %v261 = vand.u32 %v57, 4294901760
    %v262 = vsub.f32 %v57, %v261
    %263 = vmatpush1.msra.mxu0 %v262
    %264 = vmatprep.subr.mxu0 0.0
    %265 = vmatpush2.msra.mxu0 0.0
    %266 = vmatprep.subr.mxu0 0.0
    %267 = vmatpush2.msra.mxu0 0.0
    %268 = vmatprep.subr.mxu0 0.0
    %269 = vmatpush2.msra.mxu0 0.0
    %270 = vmatprep.subr.mxu0 0.0
    %271 = vmatpush2.msra.mxu0 0.0
    %272 = vmatprep.subr.mxu0 0.0
    %273 = vmatpush2.msra.mxu0 0.0
    %274 = vmatprep.subr.mxu0 0.0
    %275 = vmatpush2.msra.mxu0 0.0
    %276 = vmatprep.subr.mxu0 0.0
    %277 = vmatpush2.msra.mxu0 0.0
    %278 = vmatprep.subr.mxu0 0.0
    %279 = vmatpush2.msra.mxu0 0.0
    %280 = vmatprep.subr.mxu0 0.0
    %281 = vmatpush2.msra.mxu0 0.0
    %282 = vmatprep.subr.mxu0 0.0
    %283 = vmatpush2.msra.mxu0 0.0
    %284 = vmatprep.subr.mxu0 0.0
    %285 = vmatpush2.msra.mxu0 0.0
    %286 = vmatprep.subr.mxu0 0.0
    %287 = vmatpush2.msra.mxu0 0.0
    %288 = vmatprep.subr.mxu0 0.0
    %289 = vmatpush2.msra.mxu0 0.0
    %290 = vmatprep.subr.mxu0 0.0
    %291 = vmatpush2.msra.mxu0 0.0
    %292 = vmatprep.subr.mxu0 0.0
    %293 = vmatpush2.msra.mxu0 0.0
    %294 = vmatprep.subr.mxu0 0.0
    %295 = vmatpush2.msra.mxu0 0.0
    %296 = vmatprep.mubr.f32.mxu0 0.0
    %v297 = vand.u32 %v68, 4294901760
    %v298 = vsub.f32 %v68, %v297
    %299 = vmatmul.mubr.f32.gmra.mxu0 %v298
    %v300 = vpop.f32.mrf.mxu0
    %v301 = vadd.f32 %v225, %v300
    %v302 = vpop.f32.mrf.mxu0
    %303 = vdwg.mxu0
    %304 = vmatprep.subr.mxu0 0.0
    %305 = vmatpush1.msra.mxu0 0.0
    %306 = vmatprep.subr.mxu0 0.0
    %307 = vmatpush1.msra.mxu0 0.0
    %308 = vmatprep.subr.mxu0 0.0
    %309 = vmatpush1.msra.mxu0 0.0
    %310 = vmatprep.subr.mxu0 0.0
    %311 = vmatpush1.msra.mxu0 0.0
    %312 = vmatprep.subr.mxu0 0.0
    %313 = vmatpush1.msra.mxu0 0.0
    %314 = vmatprep.subr.mxu0 0.0
    %315 = vmatpush1.msra.mxu0 0.0
    %316 = vmatprep.subr.mxu0 0.0
    %317 = vmatpush1.msra.mxu0 0.0
    %318 = vmatprep.subr.mxu0 0.0
    %319 = vmatpush1.msra.mxu0 0.0
    %320 = vmatprep.subr.mxu0 0.0
    %321 = vmatpush1.msra.mxu0 0.0
    %322 = vmatprep.subr.mxu0 0.0
    %323 = vmatpush1.msra.mxu0 0.0
    %324 = vmatprep.subr.mxu0 0.0
    %325 = vmatpush1.msra.mxu0 0.0
    %326 = vmatprep.subr.mxu0 0.0
    %327 = vmatpush1.msra.mxu0 0.0
    %328 = vmatprep.subr.mxu0 0.0
    %329 = vmatpush1.msra.mxu0 0.0
    %330 = vmatprep.subr.mxu0 0.0
    %331 = vmatpush1.msra.mxu0 0.0
    %332 = vmatprep.subr.mxu0 0.0
    %v333 = vand.u32 %v58, 4294901760
    %334 = vmatpush1.msra.mxu0 %v333
    %335 = vmatprep.subr.mxu0 0.0
    %v336 = vand.u32 %v57, 4294901760
    %337 = vmatpush1.msra.mxu0 %v336
    %338 = vmatprep.subr.mxu0 0.0
    %339 = vmatpush2.msra.mxu0 0.0
    %340 = vmatprep.subr.mxu0 0.0
    %341 = vmatpush2.msra.mxu0 0.0
    %342 = vmatprep.subr.mxu0 0.0
    %343 = vmatpush2.msra.mxu0 0.0
    %344 = vmatprep.subr.mxu0 0.0
    %345 = vmatpush2.msra.mxu0 0.0
    %346 = vmatprep.subr.mxu0 0.0
    %347 = vmatpush2.msra.mxu0 0.0
    %348 = vmatprep.subr.mxu0 0.0
    %349 = vmatpush2.msra.mxu0 0.0
    %350 = vmatprep.subr.mxu0 0.0
    %351 = vmatpush2.msra.mxu0 0.0
    %352 = vmatprep.subr.mxu0 0.0
    %353 = vmatpush2.msra.mxu0 0.0
    %354 = vmatprep.subr.mxu0 0.0
    %355 = vmatpush2.msra.mxu0 0.0
    %356 = vmatprep.subr.mxu0 0.0
    %357 = vmatpush2.msra.mxu0 0.0
    %358 = vmatprep.subr.mxu0 0.0
    %359 = vmatpush2.msra.mxu0 0.0
    %360 = vmatprep.subr.mxu0 0.0
    %361 = vmatpush2.msra.mxu0 0.0
    %362 = vmatprep.subr.mxu0 0.0
    %363 = vmatpush2.msra.mxu0 0.0
    %364 = vmatprep.subr.mxu0 0.0
    %365 = vmatpush2.msra.mxu0 0.0
    %366 = vmatprep.subr.mxu0 0.0
    %367 = vmatpush2.msra.mxu0 0.0
    %368 = vmatprep.subr.mxu0 0.0
    %369 = vmatpush2.msra.mxu0 0.0
    %370 = vmatprep.mubr.f32.mxu0 0.0
    %v371 = vand.u32 %v68, 4294901760
    %v372 = vsub.f32 %v68, %v371
    %v373 = vand.u32 %v372, 4294901760
    %374 = vmatmul.mubr.f32.gmra.mxu0 %v373
    %v375 = vpop.f32.mrf.mxu0
    %v376 = vadd.f32 %v301, %v375
    %v377 = vpop.f32.mrf.mxu0
    %378 = vdwg.mxu0
    %379 = vmatprep.subr.mxu0 0.0
    %380 = vmatpush1.msra.mxu0 0.0
    %381 = vmatprep.subr.mxu0 0.0
    %382 = vmatpush1.msra.mxu0 0.0
    %383 = vmatprep.subr.mxu0 0.0
    %384 = vmatpush1.msra.mxu0 0.0
    %385 = vmatprep.subr.mxu0 0.0
    %386 = vmatpush1.msra.mxu0 0.0
    %387 = vmatprep.subr.mxu0 0.0
    %388 = vmatpush1.msra.mxu0 0.0
    %389 = vmatprep.subr.mxu0 0.0
    %390 = vmatpush1.msra.mxu0 0.0
    %391 = vmatprep.subr.mxu0 0.0
    %392 = vmatpush1.msra.mxu0 0.0
    %393 = vmatprep.subr.mxu0 0.0
    %394 = vmatpush1.msra.mxu0 0.0
    %395 = vmatprep.subr.mxu0 0.0
    %396 = vmatpush1.msra.mxu0 0.0
    %397 = vmatprep.subr.mxu0 0.0
    %398 = vmatpush1.msra.mxu0 0.0
    %399 = vmatprep.subr.mxu0 0.0
    %400 = vmatpush1.msra.mxu0 0.0
    %401 = vmatprep.subr.mxu0 0.0
    %402 = vmatpush1.msra.mxu0 0.0
    %403 = vmatprep.subr.mxu0 0.0
    %404 = vmatpush1.msra.mxu0 0.0
    %405 = vmatprep.subr.mxu0 0.0
    %406 = vmatpush1.msra.mxu0 0.0
    %407 = vmatprep.subr.mxu0 0.0
    %v408 = vand.u32 %v58, 4294901760
    %v409 = vsub.f32 %v58, %v408
    %v410 = vand.u32 %v409, 4294901760
    %411 = vmatpush1.msra.mxu0 %v410
    %412 = vmatprep.subr.mxu0 0.0
    %v413 = vand.u32 %v57, 4294901760
    %v414 = vsub.f32 %v57, %v413
    %v415 = vand.u32 %v414, 4294901760
    %416 = vmatpush1.msra.mxu0 %v415
    %417 = vmatprep.subr.mxu0 0.0
    %418 = vmatpush2.msra.mxu0 0.0
    %419 = vmatprep.subr.mxu0 0.0
    %420 = vmatpush2.msra.mxu0 0.0
    %421 = vmatprep.subr.mxu0 0.0
    %422 = vmatpush2.msra.mxu0 0.0
    %423 = vmatprep.subr.mxu0 0.0
    %424 = vmatpush2.msra.mxu0 0.0
    %425 = vmatprep.subr.mxu0 0.0
    %426 = vmatpush2.msra.mxu0 0.0
    %427 = vmatprep.subr.mxu0 0.0
    %428 = vmatpush2.msra.mxu0 0.0
    %429 = vmatprep.subr.mxu0 0.0
    %430 = vmatpush2.msra.mxu0 0.0
    %431 = vmatprep.subr.mxu0 0.0
    %432 = vmatpush2.msra.mxu0 0.0
    %433 = vmatprep.subr.mxu0 0.0
    %434 = vmatpush2.msra.mxu0 0.0
    %435 = vmatprep.subr.mxu0 0.0
    %436 = vmatpush2.msra.mxu0 0.0
    %437 = vmatprep.subr.mxu0 0.0
    %438 = vmatpush2.msra.mxu0 0.0
    %439 = vmatprep.subr.mxu0 0.0
    %440 = vmatpush2.msra.mxu0 0.0
    %441 = vmatprep.subr.mxu0 0.0
    %442 = vmatpush2.msra.mxu0 0.0
    %443 = vmatprep.subr.mxu0 0.0
    %444 = vmatpush2.msra.mxu0 0.0
    %445 = vmatprep.subr.mxu0 0.0
    %446 = vmatpush2.msra.mxu0 0.0
    %447 = vmatprep.subr.mxu0 0.0
    %448 = vmatpush2.msra.mxu0 0.0
    %449 = vmatprep.mubr.f32.mxu0 0.0
    %v450 = vand.u32 %v68, 4294901760
    %451 = vmatmul.mubr.f32.gmra.mxu0 %v450
    %v452 = vpop.f32.mrf.mxu0
    %v453 = vadd.f32 %v376, %v452
    %v454 = vpop.f32.mrf.mxu0
    %455 = vdwg.mxu0
    %456 = vmatprep.subr.mxu0 0.0
    %457 = vmatpush1.msra.mxu0 0.0
    %458 = vmatprep.subr.mxu0 0.0
    %459 = vmatpush1.msra.mxu0 0.0
    %460 = vmatprep.subr.mxu0 0.0
    %461 = vmatpush1.msra.mxu0 0.0
    %462 = vmatprep.subr.mxu0 0.0
    %463 = vmatpush1.msra.mxu0 0.0
    %464 = vmatprep.subr.mxu0 0.0
    %465 = vmatpush1.msra.mxu0 0.0
    %466 = vmatprep.subr.mxu0 0.0
    %467 = vmatpush1.msra.mxu0 0.0
    %468 = vmatprep.subr.mxu0 0.0
    %469 = vmatpush1.msra.mxu0 0.0
    %470 = vmatprep.subr.mxu0 0.0
    %471 = vmatpush1.msra.mxu0 0.0
    %472 = vmatprep.subr.mxu0 0.0
    %473 = vmatpush1.msra.mxu0 0.0
    %474 = vmatprep.subr.mxu0 0.0
    %475 = vmatpush1.msra.mxu0 0.0
    %476 = vmatprep.subr.mxu0 0.0
    %477 = vmatpush1.msra.mxu0 0.0
    %478 = vmatprep.subr.mxu0 0.0
    %479 = vmatpush1.msra.mxu0 0.0
    %480 = vmatprep.subr.mxu0 0.0
    %481 = vmatpush1.msra.mxu0 0.0
    %482 = vmatprep.subr.mxu0 0.0
    %483 = vmatpush1.msra.mxu0 0.0
    %484 = vmatprep.subr.mxu0 0.0
    %v485 = vand.u32 %v58, 4294901760
    %486 = vmatpush1.msra.mxu0 %v485
    %487 = vmatprep.subr.mxu0 0.0
    %v488 = vand.u32 %v57, 4294901760
    %489 = vmatpush1.msra.mxu0 %v488
    %490 = vmatprep.subr.mxu0 0.0
    %491 = vmatpush2.msra.mxu0 0.0
    %492 = vmatprep.subr.mxu0 0.0
    %493 = vmatpush2.msra.mxu0 0.0
    %494 = vmatprep.subr.mxu0 0.0
    %495 = vmatpush2.msra.mxu0 0.0
    %496 = vmatprep.subr.mxu0 0.0
    %497 = vmatpush2.msra.mxu0 0.0
    %498 = vmatprep.subr.mxu0 0.0
    %499 = vmatpush2.msra.mxu0 0.0
    %500 = vmatprep.subr.mxu0 0.0
    %501 = vmatpush2.msra.mxu0 0.0
    %502 = vmatprep.subr.mxu0 0.0
    %503 = vmatpush2.msra.mxu0 0.0
    %504 = vmatprep.subr.mxu0 0.0
    %505 = vmatpush2.msra.mxu0 0.0
    %506 = vmatprep.subr.mxu0 0.0
    %507 = vmatpush2.msra.mxu0 0.0
    %508 = vmatprep.subr.mxu0 0.0
    %509 = vmatpush2.msra.mxu0 0.0
    %510 = vmatprep.subr.mxu0 0.0
    %511 = vmatpush2.msra.mxu0 0.0
    %512 = vmatprep.subr.mxu0 0.0
    %513 = vmatpush2.msra.mxu0 0.0
    %514 = vmatprep.subr.mxu0 0.0
    %515 = vmatpush2.msra.mxu0 0.0
    %516 = vmatprep.subr.mxu0 0.0
    %517 = vmatpush2.msra.mxu0 0.0
    %518 = vmatprep.subr.mxu0 0.0
    %519 = vmatpush2.msra.mxu0 0.0
    %520 = vmatprep.subr.mxu0 0.0
    %521 = vmatpush2.msra.mxu0 0.0
    %522 = vmatprep.mubr.f32.mxu0 0.0
    %v523 = vand.u32 %v68, 4294901760
    %524 = vmatmul.mubr.f32.gmra.mxu0 %v523
    %v525 = vpop.f32.mrf.mxu0
    %v526 = vadd.f32 %v453, %v525
    %v527 = vpop.f32.mrf.mxu0
    %528 = vdwg.mxu0
    %v529 = vmax.f32 %v526, 0.0
    %v530 = vld [vmem:[%s3] sm:$0xff]
    %v531 = vld [vmem:[%s3 + $0x8] sm:$0xff]
    %v532 = vld [vmem:[%s3 + $0x10] sm:$0xff]
    %v533 = vld [vmem:[%s3 + $0x18] sm:$0xff]
    %v534 = vld [vmem:[%s4] sm:$0x1]
    %v536 = vlaneseq
    %v537 = vshrl.u32 %v536, 7
    %v538 = vsub.s32 0, %v537
    %v539 = vrot.slane %v534, %v538
    %vm541 = vcmask 261120
    %v543 = vsel %vm541, %v529, 0
    %545 = vmatprep.subr.mxu0 0.0
    %546 = vmatpush1.msra.mxu0 0.0
    %547 = vmatprep.subr.mxu0 0.0
    %548 = vmatpush1.msra.mxu0 0.0
    %549 = vmatprep.subr.mxu0 0.0
    %550 = vmatpush1.msra.mxu0 0.0
    %551 = vmatprep.subr.mxu0 0.0
    %552 = vmatpush1.msra.mxu0 0.0
    %553 = vmatprep.subr.mxu0 0.0
    %554 = vmatpush1.msra.mxu0 0.0
    %555 = vmatprep.subr.mxu0 0.0
    %556 = vmatpush1.msra.mxu0 0.0
    %557 = vmatprep.subr.mxu0 0.0
    %558 = vmatpush1.msra.mxu0 0.0
    %559 = vmatprep.subr.mxu0 0.0
    %560 = vmatpush1.msra.mxu0 0.0
    %561 = vmatprep.subr.mxu0 0.0
    %562 = vmatpush1.msra.mxu0 0.0
    %563 = vmatprep.subr.mxu0 0.0
    %564 = vmatpush1.msra.mxu0 0.0
    %565 = vmatprep.subr.mxu0 0.0
    %566 = vmatpush1.msra.mxu0 0.0
    %567 = vmatprep.subr.mxu0 0.0
    %568 = vmatpush1.msra.mxu0 0.0
    %569 = vmatprep.subr.mxu0 0.0
    %v570 = vand.u32 %v533, 4294901760
    %571 = vmatpush1.msra.mxu0 %v570
    %572 = vmatprep.subr.mxu0 0.0
    %v573 = vand.u32 %v532, 4294901760
    %574 = vmatpush1.msra.mxu0 %v573
    %575 = vmatprep.subr.mxu0 0.0
    %v576 = vand.u32 %v531, 4294901760
    %577 = vmatpush1.msra.mxu0 %v576
    %578 = vmatprep.subr.mxu0 0.0
    %v579 = vand.u32 %v530, 4294901760
    %580 = vmatpush1.msra.mxu0 %v579
    %581 = vmatprep.subr.mxu0 0.0
    %582 = vmatpush2.msra.mxu0 0.0
    %583 = vmatprep.subr.mxu0 0.0
    %584 = vmatpush2.msra.mxu0 0.0
    %585 = vmatprep.subr.mxu0 0.0
    %586 = vmatpush2.msra.mxu0 0.0
    %587 = vmatprep.subr.mxu0 0.0
    %588 = vmatpush2.msra.mxu0 0.0
    %589 = vmatprep.subr.mxu0 0.0
    %590 = vmatpush2.msra.mxu0 0.0
    %591 = vmatprep.subr.mxu0 0.0
    %592 = vmatpush2.msra.mxu0 0.0
    %593 = vmatprep.subr.mxu0 0.0
    %594 = vmatpush2.msra.mxu0 0.0
    %595 = vmatprep.subr.mxu0 0.0
    %596 = vmatpush2.msra.mxu0 0.0
    %597 = vmatprep.subr.mxu0 0.0
    %598 = vmatpush2.msra.mxu0 0.0
    %599 = vmatprep.subr.mxu0 0.0
    %600 = vmatpush2.msra.mxu0 0.0
    %601 = vmatprep.subr.mxu0 0.0
    %602 = vmatpush2.msra.mxu0 0.0
    %603 = vmatprep.subr.mxu0 0.0
    %604 = vmatpush2.msra.mxu0 0.0
    %605 = vmatprep.subr.mxu0 0.0
    %606 = vmatpush2.msra.mxu0 0.0
    %607 = vmatprep.subr.mxu0 0.0
    %608 = vmatpush2.msra.mxu0 0.0
    %609 = vmatprep.subr.mxu0 0.0
    %610 = vmatpush2.msra.mxu0 0.0
    %611 = vmatprep.subr.mxu0 0.0
    %612 = vmatpush2.msra.mxu0 0.0
    %613 = vmatprep.mubr.f32.mxu0 0.0
    %v614 = vand.u32 %v543, 4294901760
    %v615 = vsub.f32 %v543, %v614
    %v616 = vand.u32 %v615, 4294901760
    %v617 = vsub.f32 %v615, %v616
    %v618 = vand.u32 %v617, 4294901760
    %619 = vmatmul.mubr.f32.gmra.mxu0 %v618
    %v620 = vpop.f32.mrf.mxu0
    %v621 = vadd.f32 %v539, %v620
    %v622 = vpop.f32.mrf.mxu0
    %623 = vdwg.mxu0
    %624 = vmatprep.subr.mxu0 0.0
    %625 = vmatpush1.msra.mxu0 0.0
    %626 = vmatprep.subr.mxu0 0.0
    %627 = vmatpush1.msra.mxu0 0.0
    %628 = vmatprep.subr.mxu0 0.0
    %629 = vmatpush1.msra.mxu0 0.0
    %630 = vmatprep.subr.mxu0 0.0
    %631 = vmatpush1.msra.mxu0 0.0
    %632 = vmatprep.subr.mxu0 0.0
    %633 = vmatpush1.msra.mxu0 0.0
    %634 = vmatprep.subr.mxu0 0.0
    %635 = vmatpush1.msra.mxu0 0.0
    %636 = vmatprep.subr.mxu0 0.0
    %637 = vmatpush1.msra.mxu0 0.0
    %638 = vmatprep.subr.mxu0 0.0
    %639 = vmatpush1.msra.mxu0 0.0
    %640 = vmatprep.subr.mxu0 0.0
    %641 = vmatpush1.msra.mxu0 0.0
    %642 = vmatprep.subr.mxu0 0.0
    %643 = vmatpush1.msra.mxu0 0.0
    %644 = vmatprep.subr.mxu0 0.0
    %645 = vmatpush1.msra.mxu0 0.0
    %646 = vmatprep.subr.mxu0 0.0
    %647 = vmatpush1.msra.mxu0 0.0
    %648 = vmatprep.subr.mxu0 0.0
    %v649 = vand.u32 %v533, 4294901760
    %v650 = vsub.f32 %v533, %v649
    %v651 = vand.u32 %v650, 4294901760
    %v652 = vsub.f32 %v650, %v651
    %v653 = vand.u32 %v652, 4294901760
    %654 = vmatpush1.msra.mxu0 %v653
    %655 = vmatprep.subr.mxu0 0.0
    %v656 = vand.u32 %v532, 4294901760
    %v657 = vsub.f32 %v532, %v656
    %v658 = vand.u32 %v657, 4294901760
    %v659 = vsub.f32 %v657, %v658
    %v660 = vand.u32 %v659, 4294901760
    %661 = vmatpush1.msra.mxu0 %v660
    %662 = vmatprep.subr.mxu0 0.0
    %v663 = vand.u32 %v531, 4294901760
    %v664 = vsub.f32 %v531, %v663
    %v665 = vand.u32 %v664, 4294901760
    %v666 = vsub.f32 %v664, %v665
    %v667 = vand.u32 %v666, 4294901760
    %668 = vmatpush1.msra.mxu0 %v667
    %669 = vmatprep.subr.mxu0 0.0
    %v670 = vand.u32 %v530, 4294901760
    %v671 = vsub.f32 %v530, %v670
    %v672 = vand.u32 %v671, 4294901760
    %v673 = vsub.f32 %v671, %v672
    %v674 = vand.u32 %v673, 4294901760
    %675 = vmatpush1.msra.mxu0 %v674
    %676 = vmatprep.subr.mxu0 0.0
    %677 = vmatpush2.msra.mxu0 0.0
    %678 = vmatprep.subr.mxu0 0.0
    %679 = vmatpush2.msra.mxu0 0.0
    %680 = vmatprep.subr.mxu0 0.0
    %681 = vmatpush2.msra.mxu0 0.0
    %682 = vmatprep.subr.mxu0 0.0
    %683 = vmatpush2.msra.mxu0 0.0
    %684 = vmatprep.subr.mxu0 0.0
    %685 = vmatpush2.msra.mxu0 0.0
    %686 = vmatprep.subr.mxu0 0.0
    %687 = vmatpush2.msra.mxu0 0.0
    %688 = vmatprep.subr.mxu0 0.0
    %689 = vmatpush2.msra.mxu0 0.0
    %690 = vmatprep.subr.mxu0 0.0
    %691 = vmatpush2.msra.mxu0 0.0
    %692 = vmatprep.subr.mxu0 0.0
    %693 = vmatpush2.msra.mxu0 0.0
    %694 = vmatprep.subr.mxu0 0.0
    %695 = vmatpush2.msra.mxu0 0.0
    %696 = vmatprep.subr.mxu0 0.0
    %697 = vmatpush2.msra.mxu0 0.0
    %698 = vmatprep.subr.mxu0 0.0
    %699 = vmatpush2.msra.mxu0 0.0
    %700 = vmatprep.subr.mxu0 0.0
    %701 = vmatpush2.msra.mxu0 0.0
    %702 = vmatprep.subr.mxu0 0.0
    %703 = vmatpush2.msra.mxu0 0.0
    %704 = vmatprep.subr.mxu0 0.0
    %705 = vmatpush2.msra.mxu0 0.0
    %706 = vmatprep.subr.mxu0 0.0
    %707 = vmatpush2.msra.mxu0 0.0
    %708 = vmatprep.mubr.f32.mxu0 0.0
    %v709 = vand.u32 %v543, 4294901760
    %710 = vmatmul.mubr.f32.gmra.mxu0 %v709
    %v711 = vpop.f32.mrf.mxu0
    %v712 = vadd.f32 %v621, %v711
    %v713 = vpop.f32.mrf.mxu0
    %714 = vdwg.mxu0
    %715 = vmatprep.subr.mxu0 0.0
    %716 = vmatpush1.msra.mxu0 0.0
    %717 = vmatprep.subr.mxu0 0.0
    %718 = vmatpush1.msra.mxu0 0.0
    %719 = vmatprep.subr.mxu0 0.0
    %720 = vmatpush1.msra.mxu0 0.0
    %721 = vmatprep.subr.mxu0 0.0
    %722 = vmatpush1.msra.mxu0 0.0
    %723 = vmatprep.subr.mxu0 0.0
    %724 = vmatpush1.msra.mxu0 0.0
    %725 = vmatprep.subr.mxu0 0.0
    %726 = vmatpush1.msra.mxu0 0.0
    %727 = vmatprep.subr.mxu0 0.0
    %728 = vmatpush1.msra.mxu0 0.0
    %729 = vmatprep.subr.mxu0 0.0
    %730 = vmatpush1.msra.mxu0 0.0
    %731 = vmatprep.subr.mxu0 0.0
    %732 = vmatpush1.msra.mxu0 0.0
    %733 = vmatprep.subr.mxu0 0.0
    %734 = vmatpush1.msra.mxu0 0.0
    %735 = vmatprep.subr.mxu0 0.0
    %736 = vmatpush1.msra.mxu0 0.0
    %737 = vmatprep.subr.mxu0 0.0
    %738 = vmatpush1.msra.mxu0 0.0
    %739 = vmatprep.subr.mxu0 0.0
    %v740 = vand.u32 %v533, 4294901760
    %v741 = vsub.f32 %v533, %v740
    %742 = vmatpush1.msra.mxu0 %v741
    %743 = vmatprep.subr.mxu0 0.0
    %v744 = vand.u32 %v532, 4294901760
    %v745 = vsub.f32 %v532, %v744
    %746 = vmatpush1.msra.mxu0 %v745
    %747 = vmatprep.subr.mxu0 0.0
    %v748 = vand.u32 %v531, 4294901760
    %v749 = vsub.f32 %v531, %v748
    %750 = vmatpush1.msra.mxu0 %v749
    %751 = vmatprep.subr.mxu0 0.0
    %v752 = vand.u32 %v530, 4294901760
    %v753 = vsub.f32 %v530, %v752
    %754 = vmatpush1.msra.mxu0 %v753
    %755 = vmatprep.subr.mxu0 0.0
    %756 = vmatpush2.msra.mxu0 0.0
    %757 = vmatprep.subr.mxu0 0.0
    %758 = vmatpush2.msra.mxu0 0.0
    %759 = vmatprep.subr.mxu0 0.0
    %760 = vmatpush2.msra.mxu0 0.0
    %761 = vmatprep.subr.mxu0 0.0
    %762 = vmatpush2.msra.mxu0 0.0
    %763 = vmatprep.subr.mxu0 0.0
    %764 = vmatpush2.msra.mxu0 0.0
    %765 = vmatprep.subr.mxu0 0.0
    %766 = vmatpush2.msra.mxu0 0.0
    %767 = vmatprep.subr.mxu0 0.0
    %768 = vmatpush2.msra.mxu0 0.0
    %769 = vmatprep.subr.mxu0 0.0
    %770 = vmatpush2.msra.mxu0 0.0
    %771 = vmatprep.subr.mxu0 0.0
    %772 = vmatpush2.msra.mxu0 0.0
    %773 = vmatprep.subr.mxu0 0.0
    %774 = vmatpush2.msra.mxu0 0.0
    %775 = vmatprep.subr.mxu0 0.0
    %776 = vmatpush2.msra.mxu0 0.0
    %777 = vmatprep.subr.mxu0 0.0
    %778 = vmatpush2.msra.mxu0 0.0
    %779 = vmatprep.subr.mxu0 0.0
    %780 = vmatpush2.msra.mxu0 0.0
    %781 = vmatprep.subr.mxu0 0.0
    %782 = vmatpush2.msra.mxu0 0.0
    %783 = vmatprep.subr.mxu0 0.0
    %784 = vmatpush2.msra.mxu0 0.0
    %785 = vmatprep.subr.mxu0 0.0
    %786 = vmatpush2.msra.mxu0 0.0
    %787 = vmatprep.mubr.f32.mxu0 0.0
    %v788 = vand.u32 %v543, 4294901760
    %v789 = vsub.f32 %v543, %v788
    %790 = vmatmul.mubr.f32.gmra.mxu0 %v789
    %v791 = vpop.f32.mrf.mxu0
    %v792 = vadd.f32 %v712, %v791
    %v793 = vpop.f32.mrf.mxu0
    %794 = vdwg.mxu0
    %795 = vmatprep.subr.mxu0 0.0
    %796 = vmatpush1.msra.mxu0 0.0
    %797 = vmatprep.subr.mxu0 0.0
    %798 = vmatpush1.msra.mxu0 0.0
    %799 = vmatprep.subr.mxu0 0.0
    %800 = vmatpush1.msra.mxu0 0.0
    %801 = vmatprep.subr.mxu0 0.0
    %802 = vmatpush1.msra.mxu0 0.0
    %803 = vmatprep.subr.mxu0 0.0
    %804 = vmatpush1.msra.mxu0 0.0
    %805 = vmatprep.subr.mxu0 0.0
    %806 = vmatpush1.msra.mxu0 0.0
    %807 = vmatprep.subr.mxu0 0.0
    %808 = vmatpush1.msra.mxu0 0.0
    %809 = vmatprep.subr.mxu0 0.0
    %810 = vmatpush1.msra.mxu0 0.0
    %811 = vmatprep.subr.mxu0 0.0
    %812 = vmatpush1.msra.mxu0 0.0
    %813 = vmatprep.subr.mxu0 0.0
    %814 = vmatpush1.msra.mxu0 0.0
    %815 = vmatprep.subr.mxu0 0.0
    %816 = vmatpush1.msra.mxu0 0.0
    %817 = vmatprep.subr.mxu0 0.0
    %818 = vmatpush1.msra.mxu0 0.0
    %819 = vmatprep.subr.mxu0 0.0
    %v820 = vand.u32 %v533, 4294901760
    %821 = vmatpush1.msra.mxu0 %v820
    %822 = vmatprep.subr.mxu0 0.0
    %v823 = vand.u32 %v532, 4294901760
    %824 = vmatpush1.msra.mxu0 %v823
    %825 = vmatprep.subr.mxu0 0.0
    %v826 = vand.u32 %v531, 4294901760
    %827 = vmatpush1.msra.mxu0 %v826
    %828 = vmatprep.subr.mxu0 0.0
    %v829 = vand.u32 %v530, 4294901760
    %830 = vmatpush1.msra.mxu0 %v829
    %831 = vmatprep.subr.mxu0 0.0
    %832 = vmatpush2.msra.mxu0 0.0
    %833 = vmatprep.subr.mxu0 0.0
    %834 = vmatpush2.msra.mxu0 0.0
    %835 = vmatprep.subr.mxu0 0.0
    %836 = vmatpush2.msra.mxu0 0.0
    %837 = vmatprep.subr.mxu0 0.0
    %838 = vmatpush2.msra.mxu0 0.0
    %839 = vmatprep.subr.mxu0 0.0
    %840 = vmatpush2.msra.mxu0 0.0
    %841 = vmatprep.subr.mxu0 0.0
    %842 = vmatpush2.msra.mxu0 0.0
    %843 = vmatprep.subr.mxu0 0.0
    %844 = vmatpush2.msra.mxu0 0.0
    %845 = vmatprep.subr.mxu0 0.0
    %846 = vmatpush2.msra.mxu0 0.0
    %847 = vmatprep.subr.mxu0 0.0
    %848 = vmatpush2.msra.mxu0 0.0
    %849 = vmatprep.subr.mxu0 0.0
    %850 = vmatpush2.msra.mxu0 0.0
    %851 = vmatprep.subr.mxu0 0.0
    %852 = vmatpush2.msra.mxu0 0.0
    %853 = vmatprep.subr.mxu0 0.0
    %854 = vmatpush2.msra.mxu0 0.0
    %855 = vmatprep.subr.mxu0 0.0
    %856 = vmatpush2.msra.mxu0 0.0
    %857 = vmatprep.subr.mxu0 0.0
    %858 = vmatpush2.msra.mxu0 0.0
    %859 = vmatprep.subr.mxu0 0.0
    %860 = vmatpush2.msra.mxu0 0.0
    %861 = vmatprep.subr.mxu0 0.0
    %862 = vmatpush2.msra.mxu0 0.0
    %863 = vmatprep.mubr.f32.mxu0 0.0
    %v864 = vand.u32 %v543, 4294901760
    %v865 = vsub.f32 %v543, %v864
    %v866 = vand.u32 %v865, 4294901760
    %867 = vmatmul.mubr.f32.gmra.mxu0 %v866
    %v868 = vpop.f32.mrf.mxu0
    %v869 = vadd.f32 %v792, %v868
    %v870 = vpop.f32.mrf.mxu0
    %871 = vdwg.mxu0
    %872 = vmatprep.subr.mxu0 0.0
    %873 = vmatpush1.msra.mxu0 0.0
    %874 = vmatprep.subr.mxu0 0.0
    %875 = vmatpush1.msra.mxu0 0.0
    %876 = vmatprep.subr.mxu0 0.0
    %877 = vmatpush1.msra.mxu0 0.0
    %878 = vmatprep.subr.mxu0 0.0
    %879 = vmatpush1.msra.mxu0 0.0
    %880 = vmatprep.subr.mxu0 0.0
    %881 = vmatpush1.msra.mxu0 0.0
    %882 = vmatprep.subr.mxu0 0.0
    %883 = vmatpush1.msra.mxu0 0.0
    %884 = vmatprep.subr.mxu0 0.0
    %885 = vmatpush1.msra.mxu0 0.0
    %886 = vmatprep.subr.mxu0 0.0
    %887 = vmatpush1.msra.mxu0 0.0
    %888 = vmatprep.subr.mxu0 0.0
    %889 = vmatpush1.msra.mxu0 0.0
    %890 = vmatprep.subr.mxu0 0.0
    %891 = vmatpush1.msra.mxu0 0.0
    %892 = vmatprep.subr.mxu0 0.0
    %893 = vmatpush1.msra.mxu0 0.0
    %894 = vmatprep.subr.mxu0 0.0
    %895 = vmatpush1.msra.mxu0 0.0
    %896 = vmatprep.subr.mxu0 0.0
    %v897 = vand.u32 %v533, 4294901760
    %v898 = vsub.f32 %v533, %v897
    %v899 = vand.u32 %v898, 4294901760
    %900 = vmatpush1.msra.mxu0 %v899
    %901 = vmatprep.subr.mxu0 0.0
    %v902 = vand.u32 %v532, 4294901760
    %v903 = vsub.f32 %v532, %v902
    %v904 = vand.u32 %v903, 4294901760
    %905 = vmatpush1.msra.mxu0 %v904
    %906 = vmatprep.subr.mxu0 0.0
    %v907 = vand.u32 %v531, 4294901760
    %v908 = vsub.f32 %v531, %v907
    %v909 = vand.u32 %v908, 4294901760
    %910 = vmatpush1.msra.mxu0 %v909
    %911 = vmatprep.subr.mxu0 0.0
    %v912 = vand.u32 %v530, 4294901760
    %v913 = vsub.f32 %v530, %v912
    %v914 = vand.u32 %v913, 4294901760
    %915 = vmatpush1.msra.mxu0 %v914
    %916 = vmatprep.subr.mxu0 0.0
    %917 = vmatpush2.msra.mxu0 0.0
    %918 = vmatprep.subr.mxu0 0.0
    %919 = vmatpush2.msra.mxu0 0.0
    %920 = vmatprep.subr.mxu0 0.0
    %921 = vmatpush2.msra.mxu0 0.0
    %922 = vmatprep.subr.mxu0 0.0
    %923 = vmatpush2.msra.mxu0 0.0
    %924 = vmatprep.subr.mxu0 0.0
    %925 = vmatpush2.msra.mxu0 0.0
    %926 = vmatprep.subr.mxu0 0.0
    %927 = vmatpush2.msra.mxu0 0.0
    %928 = vmatprep.subr.mxu0 0.0
    %929 = vmatpush2.msra.mxu0 0.0
    %930 = vmatprep.subr.mxu0 0.0
    %931 = vmatpush2.msra.mxu0 0.0
    %932 = vmatprep.subr.mxu0 0.0
    %933 = vmatpush2.msra.mxu0 0.0
    %934 = vmatprep.subr.mxu0 0.0
    %935 = vmatpush2.msra.mxu0 0.0
    %936 = vmatprep.subr.mxu0 0.0
    %937 = vmatpush2.msra.mxu0 0.0
    %938 = vmatprep.subr.mxu0 0.0
    %939 = vmatpush2.msra.mxu0 0.0
    %940 = vmatprep.subr.mxu0 0.0
    %941 = vmatpush2.msra.mxu0 0.0
    %942 = vmatprep.subr.mxu0 0.0
    %943 = vmatpush2.msra.mxu0 0.0
    %944 = vmatprep.subr.mxu0 0.0
    %945 = vmatpush2.msra.mxu0 0.0
    %946 = vmatprep.subr.mxu0 0.0
    %947 = vmatpush2.msra.mxu0 0.0
    %948 = vmatprep.mubr.f32.mxu0 0.0
    %v949 = vand.u32 %v543, 4294901760
    %950 = vmatmul.mubr.f32.gmra.mxu0 %v949
    %v951 = vpop.f32.mrf.mxu0
    %v952 = vadd.f32 %v869, %v951
    %v953 = vpop.f32.mrf.mxu0
    %954 = vdwg.mxu0
    %955 = vmatprep.subr.mxu0 0.0
    %956 = vmatpush1.msra.mxu0 0.0
    %957 = vmatprep.subr.mxu0 0.0
    %958 = vmatpush1.msra.mxu0 0.0
    %959 = vmatprep.subr.mxu0 0.0
    %960 = vmatpush1.msra.mxu0 0.0
    %961 = vmatprep.subr.mxu0 0.0
    %962 = vmatpush1.msra.mxu0 0.0
    %963 = vmatprep.subr.mxu0 0.0
    %964 = vmatpush1.msra.mxu0 0.0
    %965 = vmatprep.subr.mxu0 0.0
    %966 = vmatpush1.msra.mxu0 0.0
    %967 = vmatprep.subr.mxu0 0.0
    %968 = vmatpush1.msra.mxu0 0.0
    %969 = vmatprep.subr.mxu0 0.0
    %970 = vmatpush1.msra.mxu0 0.0
    %971 = vmatprep.subr.mxu0 0.0
    %972 = vmatpush1.msra.mxu0 0.0
    %973 = vmatprep.subr.mxu0 0.0
    %974 = vmatpush1.msra.mxu0 0.0
    %975 = vmatprep.subr.mxu0 0.0
    %976 = vmatpush1.msra.mxu0 0.0
    %977 = vmatprep.subr.mxu0 0.0
    %978 = vmatpush1.msra.mxu0 0.0
    %979 = vmatprep.subr.mxu0 0.0
    %v980 = vand.u32 %v533, 4294901760
    %981 = vmatpush1.msra.mxu0 %v980
    %982 = vmatprep.subr.mxu0 0.0
    %v983 = vand.u32 %v532, 4294901760
    %984 = vmatpush1.msra.mxu0 %v983
    %985 = vmatprep.subr.mxu0 0.0
    %v986 = vand.u32 %v531, 4294901760
    %987 = vmatpush1.msra.mxu0 %v986
    %988 = vmatprep.subr.mxu0 0.0
    %v989 = vand.u32 %v530, 4294901760
    %990 = vmatpush1.msra.mxu0 %v989
    %991 = vmatprep.subr.mxu0 0.0
    %992 = vmatpush2.msra.mxu0 0.0
    %993 = vmatprep.subr.mxu0 0.0
    %994 = vmatpush2.msra.mxu0 0.0
    %995 = vmatprep.subr.mxu0 0.0
    %996 = vmatpush2.msra.mxu0 0.0
    %997 = vmatprep.subr.mxu0 0.0
    %998 = vmatpush2.msra.mxu0 0.0
    %999 = vmatprep.subr.mxu0 0.0
    %1000 = vmatpush2.msra.mxu0 0.0
    %1001 = vmatprep.subr.mxu0 0.0
    %1002 = vmatpush2.msra.mxu0 0.0
    %1003 = vmatprep.subr.mxu0 0.0
    %1004 = vmatpush2.msra.mxu0 0.0
    %1005 = vmatprep.subr.mxu0 0.0
    %1006 = vmatpush2.msra.mxu0 0.0
    %1007 = vmatprep.subr.mxu0 0.0
    %1008 = vmatpush2.msra.mxu0 0.0
    %1009 = vmatprep.subr.mxu0 0.0
    %1010 = vmatpush2.msra.mxu0 0.0
    %1011 = vmatprep.subr.mxu0 0.0
    %1012 = vmatpush2.msra.mxu0 0.0
    %1013 = vmatprep.subr.mxu0 0.0
    %1014 = vmatpush2.msra.mxu0 0.0
    %1015 = vmatprep.subr.mxu0 0.0
    %1016 = vmatpush2.msra.mxu0 0.0
    %1017 = vmatprep.subr.mxu0 0.0
    %1018 = vmatpush2.msra.mxu0 0.0
    %1019 = vmatprep.subr.mxu0 0.0
    %1020 = vmatpush2.msra.mxu0 0.0
    %1021 = vmatprep.subr.mxu0 0.0
    %1022 = vmatpush2.msra.mxu0 0.0
    %1023 = vmatprep.mubr.f32.mxu0 0.0
    %v1024 = vand.u32 %v543, 4294901760
    %1025 = vmatmul.mubr.f32.gmra.mxu0 %v1024
    %v1026 = vpop.f32.mrf.mxu0
    %v1027 = vadd.f32 %v952, %v1026
    %v1028 = vpop.f32.mrf.mxu0
    %1029 = vdwg.mxu0
    %v1030 = vmax.f32 %v1027, 0.0
    %v1031 = vld [vmem:[#allocation5] sm:$0xff]
    %v1032 = vld [vmem:[#allocation5 + $0x8] sm:$0xff]
    %v1033 = vld [vmem:[%s6] sm:$0xff]
    %v1034 = vld [vmem:[%s6 + $0x8] sm:$0xff]
    %v1035 = vld [vmem:[%s6 + $0x10] sm:$0xff]
    %v1036 = vld [vmem:[%s6 + $0x18] sm:$0xff]
    %v1038 = vsel %vm541, %v1030, 0
    %1040 = vmatprep.subr.mxu0 0.0
    %1041 = vmatpush1.msra.mxu0 0.0
    %1042 = vmatprep.subr.mxu0 0.0
    %1043 = vmatpush1.msra.mxu0 0.0
    %1044 = vmatprep.subr.mxu0 0.0
    %1045 = vmatpush1.msra.mxu0 0.0
    %1046 = vmatprep.subr.mxu0 0.0
    %1047 = vmatpush1.msra.mxu0 0.0
    %1048 = vmatprep.subr.mxu0 0.0
    %1049 = vmatpush1.msra.mxu0 0.0
    %1050 = vmatprep.subr.mxu0 0.0
    %1051 = vmatpush1.msra.mxu0 0.0
    %1052 = vmatprep.subr.mxu0 0.0
    %1053 = vmatpush1.msra.mxu0 0.0
    %1054 = vmatprep.subr.mxu0 0.0
    %1055 = vmatpush1.msra.mxu0 0.0
    %1056 = vmatprep.subr.mxu0 0.0
    %1057 = vmatpush1.msra.mxu0 0.0
    %1058 = vmatprep.subr.mxu0 0.0
    %1059 = vmatpush1.msra.mxu0 0.0
    %1060 = vmatprep.subr.mxu0 0.0
    %1061 = vmatpush1.msra.mxu0 0.0
    %1062 = vmatprep.subr.mxu0 0.0
    %1063 = vmatpush1.msra.mxu0 0.0
    %1064 = vmatprep.subr.mxu0 0.0
    %v1065 = vand.u32 %v1036, 4294901760
    %1066 = vmatpush1.msra.mxu0 %v1065
    %1067 = vmatprep.subr.mxu0 0.0
    %v1068 = vand.u32 %v1035, 4294901760
    %1069 = vmatpush1.msra.mxu0 %v1068
    %1070 = vmatprep.subr.mxu0 0.0
    %v1071 = vand.u32 %v1034, 4294901760
    %1072 = vmatpush1.msra.mxu0 %v1071
    %1073 = vmatprep.subr.mxu0 0.0
    %v1074 = vand.u32 %v1033, 4294901760
    %1075 = vmatpush1.msra.mxu0 %v1074
    %1076 = vmatprep.subr.mxu0 0.0
    %1077 = vmatpush2.msra.mxu0 0.0
    %1078 = vmatprep.subr.mxu0 0.0
    %1079 = vmatpush2.msra.mxu0 0.0
    %1080 = vmatprep.subr.mxu0 0.0
    %1081 = vmatpush2.msra.mxu0 0.0
    %1082 = vmatprep.subr.mxu0 0.0
    %1083 = vmatpush2.msra.mxu0 0.0
    %1084 = vmatprep.subr.mxu0 0.0
    %1085 = vmatpush2.msra.mxu0 0.0
    %1086 = vmatprep.subr.mxu0 0.0
    %1087 = vmatpush2.msra.mxu0 0.0
    %1088 = vmatprep.subr.mxu0 0.0
    %1089 = vmatpush2.msra.mxu0 0.0
    %1090 = vmatprep.subr.mxu0 0.0
    %1091 = vmatpush2.msra.mxu0 0.0
    %1092 = vmatprep.subr.mxu0 0.0
    %1093 = vmatpush2.msra.mxu0 0.0
    %1094 = vmatprep.subr.mxu0 0.0
    %1095 = vmatpush2.msra.mxu0 0.0
    %1096 = vmatprep.subr.mxu0 0.0
    %1097 = vmatpush2.msra.mxu0 0.0
    %1098 = vmatprep.subr.mxu0 0.0
    %1099 = vmatpush2.msra.mxu0 0.0
    %1100 = vmatprep.subr.mxu0 0.0
    %1101 = vmatpush2.msra.mxu0 0.0
    %1102 = vmatprep.subr.mxu0 0.0
    %1103 = vmatpush2.msra.mxu0 0.0
    %1104 = vmatprep.subr.mxu0 0.0
    %1105 = vmatpush2.msra.mxu0 0.0
    %1106 = vmatprep.subr.mxu0 0.0
    %1107 = vmatpush2.msra.mxu0 0.0
    %1108 = vmatprep.mubr.f32.mxu0 0.0
    %v1109 = vand.u32 %v1038, 4294901760
    %v1110 = vsub.f32 %v1038, %v1109
    %v1111 = vand.u32 %v1110, 4294901760
    %v1112 = vsub.f32 %v1110, %v1111
    %v1113 = vand.u32 %v1112, 4294901760
    %1114 = vmatmul.mubr.f32.gmra.mxu0 %v1113
    %v1115 = vpop.f32.mrf.mxu0
    %v1116 = vadd.f32 0.0, %v1115
    %v1117 = vpop.f32.mrf.mxu0
    %1118 = vdwg.mxu0
    %1119 = vmatprep.subr.mxu0 0.0
    %1120 = vmatpush1.msra.mxu0 0.0
    %1121 = vmatprep.subr.mxu0 0.0
    %1122 = vmatpush1.msra.mxu0 0.0
    %1123 = vmatprep.subr.mxu0 0.0
    %1124 = vmatpush1.msra.mxu0 0.0
    %1125 = vmatprep.subr.mxu0 0.0
    %1126 = vmatpush1.msra.mxu0 0.0
    %1127 = vmatprep.subr.mxu0 0.0
    %1128 = vmatpush1.msra.mxu0 0.0
    %1129 = vmatprep.subr.mxu0 0.0
    %1130 = vmatpush1.msra.mxu0 0.0
    %1131 = vmatprep.subr.mxu0 0.0
    %1132 = vmatpush1.msra.mxu0 0.0
    %1133 = vmatprep.subr.mxu0 0.0
    %1134 = vmatpush1.msra.mxu0 0.0
    %1135 = vmatprep.subr.mxu0 0.0
    %1136 = vmatpush1.msra.mxu0 0.0
    %1137 = vmatprep.subr.mxu0 0.0
    %1138 = vmatpush1.msra.mxu0 0.0
    %1139 = vmatprep.subr.mxu0 0.0
    %1140 = vmatpush1.msra.mxu0 0.0
    %1141 = vmatprep.subr.mxu0 0.0
    %1142 = vmatpush1.msra.mxu0 0.0
    %1143 = vmatprep.subr.mxu0 0.0
    %v1144 = vand.u32 %v1036, 4294901760
    %v1145 = vsub.f32 %v1036, %v1144
    %v1146 = vand.u32 %v1145, 4294901760
    %v1147 = vsub.f32 %v1145, %v1146
    %v1148 = vand.u32 %v1147, 4294901760
    %1149 = vmatpush1.msra.mxu0 %v1148
    %1150 = vmatprep.subr.mxu0 0.0
    %v1151 = vand.u32 %v1035, 4294901760
    %v1152 = vsub.f32 %v1035, %v1151
    %v1153 = vand.u32 %v1152, 4294901760
    %v1154 = vsub.f32 %v1152, %v1153
    %v1155 = vand.u32 %v1154, 4294901760
    %1156 = vmatpush1.msra.mxu0 %v1155
    %1157 = vmatprep.subr.mxu0 0.0
    %v1158 = vand.u32 %v1034, 4294901760
    %v1159 = vsub.f32 %v1034, %v1158
    %v1160 = vand.u32 %v1159, 4294901760
    %v1161 = vsub.f32 %v1159, %v1160
    %v1162 = vand.u32 %v1161, 4294901760
    %1163 = vmatpush1.msra.mxu0 %v1162
    %1164 = vmatprep.subr.mxu0 0.0
    %v1165 = vand.u32 %v1033, 4294901760
    %v1166 = vsub.f32 %v1033, %v1165
    %v1167 = vand.u32 %v1166, 4294901760
    %v1168 = vsub.f32 %v1166, %v1167
    %v1169 = vand.u32 %v1168, 4294901760
    %1170 = vmatpush1.msra.mxu0 %v1169
    %1171 = vmatprep.subr.mxu0 0.0
    %1172 = vmatpush2.msra.mxu0 0.0
    %1173 = vmatprep.subr.mxu0 0.0
    %1174 = vmatpush2.msra.mxu0 0.0
    %1175 = vmatprep.subr.mxu0 0.0
    %1176 = vmatpush2.msra.mxu0 0.0
    %1177 = vmatprep.subr.mxu0 0.0
    %1178 = vmatpush2.msra.mxu0 0.0
    %1179 = vmatprep.subr.mxu0 0.0
    %1180 = vmatpush2.msra.mxu0 0.0
    %1181 = vmatprep.subr.mxu0 0.0
    %1182 = vmatpush2.msra.mxu0 0.0
    %1183 = vmatprep.subr.mxu0 0.0
    %1184 = vmatpush2.msra.mxu0 0.0
    %1185 = vmatprep.subr.mxu0 0.0
    %1186 = vmatpush2.msra.mxu0 0.0
    %1187 = vmatprep.subr.mxu0 0.0
    %1188 = vmatpush2.msra.mxu0 0.0
    %1189 = vmatprep.subr.mxu0 0.0
    %1190 = vmatpush2.msra.mxu0 0.0
    %1191 = vmatprep.subr.mxu0 0.0
    %1192 = vmatpush2.msra.mxu0 0.0
    %1193 = vmatprep.subr.mxu0 0.0
    %1194 = vmatpush2.msra.mxu0 0.0
    %1195 = vmatprep.subr.mxu0 0.0
    %1196 = vmatpush2.msra.mxu0 0.0
    %1197 = vmatprep.subr.mxu0 0.0
    %1198 = vmatpush2.msra.mxu0 0.0
    %1199 = vmatprep.subr.mxu0 0.0
    %1200 = vmatpush2.msra.mxu0 0.0
    %1201 = vmatprep.subr.mxu0 0.0
    %1202 = vmatpush2.msra.mxu0 0.0
    %1203 = vmatprep.mubr.f32.mxu0 0.0
    %v1204 = vand.u32 %v1038, 4294901760
    %1205 = vmatmul.mubr.f32.gmra.mxu0 %v1204
    %v1206 = vpop.f32.mrf.mxu0
    %v1207 = vadd.f32 %v1116, %v1206
    %v1208 = vpop.f32.mrf.mxu0
    %1209 = vdwg.mxu0
    %1210 = vmatprep.subr.mxu0 0.0
    %1211 = vmatpush1.msra.mxu0 0.0
    %1212 = vmatprep.subr.mxu0 0.0
    %1213 = vmatpush1.msra.mxu0 0.0
    %1214 = vmatprep.subr.mxu0 0.0
    %1215 = vmatpush1.msra.mxu0 0.0
    %1216 = vmatprep.subr.mxu0 0.0
    %1217 = vmatpush1.msra.mxu0 0.0
    %1218 = vmatprep.subr.mxu0 0.0
    %1219 = vmatpush1.msra.mxu0 0.0
    %1220 = vmatprep.subr.mxu0 0.0
    %1221 = vmatpush1.msra.mxu0 0.0
    %1222 = vmatprep.subr.mxu0 0.0
    %1223 = vmatpush1.msra.mxu0 0.0
    %1224 = vmatprep.subr.mxu0 0.0
    %1225 = vmatpush1.msra.mxu0 0.0
    %1226 = vmatprep.subr.mxu0 0.0
    %1227 = vmatpush1.msra.mxu0 0.0
    %1228 = vmatprep.subr.mxu0 0.0
    %1229 = vmatpush1.msra.mxu0 0.0
    %1230 = vmatprep.subr.mxu0 0.0
    %1231 = vmatpush1.msra.mxu0 0.0
    %1232 = vmatprep.subr.mxu0 0.0
    %1233 = vmatpush1.msra.mxu0 0.0
    %1234 = vmatprep.subr.mxu0 0.0
    %v1235 = vand.u32 %v1036, 4294901760
    %v1236 = vsub.f32 %v1036, %v1235
    %1237 = vmatpush1.msra.mxu0 %v1236
    %1238 = vmatprep.subr.mxu0 0.0
    %v1239 = vand.u32 %v1035, 4294901760
    %v1240 = vsub.f32 %v1035, %v1239
    %1241 = vmatpush1.msra.mxu0 %v1240
    %1242 = vmatprep.subr.mxu0 0.0
    %v1243 = vand.u32 %v1034, 4294901760
    %v1244 = vsub.f32 %v1034, %v1243
    %1245 = vmatpush1.msra.mxu0 %v1244
    %1246 = vmatprep.subr.mxu0 0.0
    %v1247 = vand.u32 %v1033, 4294901760
    %v1248 = vsub.f32 %v1033, %v1247
    %1249 = vmatpush1.msra.mxu0 %v1248
    %1250 = vmatprep.subr.mxu0 0.0
    %1251 = vmatpush2.msra.mxu0 0.0
    %1252 = vmatprep.subr.mxu0 0.0
    %1253 = vmatpush2.msra.mxu0 0.0
    %1254 = vmatprep.subr.mxu0 0.0
    %1255 = vmatpush2.msra.mxu0 0.0
    %1256 = vmatprep.subr.mxu0 0.0
    %1257 = vmatpush2.msra.mxu0 0.0
    %1258 = vmatprep.subr.mxu0 0.0
    %1259 = vmatpush2.msra.mxu0 0.0
    %1260 = vmatprep.subr.mxu0 0.0
    %1261 = vmatpush2.msra.mxu0 0.0
    %1262 = vmatprep.subr.mxu0 0.0
    %1263 = vmatpush2.msra.mxu0 0.0
    %1264 = vmatprep.subr.mxu0 0.0
    %1265 = vmatpush2.msra.mxu0 0.0
    %1266 = vmatprep.subr.mxu0 0.0
    %1267 = vmatpush2.msra.mxu0 0.0
    %1268 = vmatprep.subr.mxu0 0.0
    %1269 = vmatpush2.msra.mxu0 0.0
    %1270 = vmatprep.subr.mxu0 0.0
    %1271 = vmatpush2.msra.mxu0 0.0
    %1272 = vmatprep.subr.mxu0 0.0
    %1273 = vmatpush2.msra.mxu0 0.0
    %1274 = vmatprep.subr.mxu0 0.0
    %1275 = vmatpush2.msra.mxu0 0.0
    %1276 = vmatprep.subr.mxu0 0.0
    %1277 = vmatpush2.msra.mxu0 0.0
    %1278 = vmatprep.subr.mxu0 0.0
    %1279 = vmatpush2.msra.mxu0 0.0
    %1280 = vmatprep.subr.mxu0 0.0
    %1281 = vmatpush2.msra.mxu0 0.0
    %1282 = vmatprep.mubr.f32.mxu0 0.0
    %v1283 = vand.u32 %v1038, 4294901760
    %v1284 = vsub.f32 %v1038, %v1283
    %1285 = vmatmul.mubr.f32.gmra.mxu0 %v1284
    %v1286 = vpop.f32.mrf.mxu0
    %v1287 = vadd.f32 %v1207, %v1286
    %v1288 = vpop.f32.mrf.mxu0
    %1289 = vdwg.mxu0
    %1290 = vmatprep.subr.mxu0 0.0
    %1291 = vmatpush1.msra.mxu0 0.0
    %1292 = vmatprep.subr.mxu0 0.0
    %1293 = vmatpush1.msra.mxu0 0.0
    %1294 = vmatprep.subr.mxu0 0.0
    %1295 = vmatpush1.msra.mxu0 0.0
    %1296 = vmatprep.subr.mxu0 0.0
    %1297 = vmatpush1.msra.mxu0 0.0
    %1298 = vmatprep.subr.mxu0 0.0
    %1299 = vmatpush1.msra.mxu0 0.0
    %1300 = vmatprep.subr.mxu0 0.0
    %1301 = vmatpush1.msra.mxu0 0.0
    %1302 = vmatprep.subr.mxu0 0.0
    %1303 = vmatpush1.msra.mxu0 0.0
    %1304 = vmatprep.subr.mxu0 0.0
    %1305 = vmatpush1.msra.mxu0 0.0
    %1306 = vmatprep.subr.mxu0 0.0
    %1307 = vmatpush1.msra.mxu0 0.0
    %1308 = vmatprep.subr.mxu0 0.0
    %1309 = vmatpush1.msra.mxu0 0.0
    %1310 = vmatprep.subr.mxu0 0.0
    %1311 = vmatpush1.msra.mxu0 0.0
    %1312 = vmatprep.subr.mxu0 0.0
    %1313 = vmatpush1.msra.mxu0 0.0
    %1314 = vmatprep.subr.mxu0 0.0
    %v1315 = vand.u32 %v1036, 4294901760
    %1316 = vmatpush1.msra.mxu0 %v1315
    %1317 = vmatprep.subr.mxu0 0.0
    %v1318 = vand.u32 %v1035, 4294901760
    %1319 = vmatpush1.msra.mxu0 %v1318
    %1320 = vmatprep.subr.mxu0 0.0
    %v1321 = vand.u32 %v1034, 4294901760
    %1322 = vmatpush1.msra.mxu0 %v1321
    %1323 = vmatprep.subr.mxu0 0.0
    %v1324 = vand.u32 %v1033, 4294901760
    %1325 = vmatpush1.msra.mxu0 %v1324
    %1326 = vmatprep.subr.mxu0 0.0
    %1327 = vmatpush2.msra.mxu0 0.0
    %1328 = vmatprep.subr.mxu0 0.0
    %1329 = vmatpush2.msra.mxu0 0.0
    %1330 = vmatprep.subr.mxu0 0.0
    %1331 = vmatpush2.msra.mxu0 0.0
    %1332 = vmatprep.subr.mxu0 0.0
    %1333 = vmatpush2.msra.mxu0 0.0
    %1334 = vmatprep.subr.mxu0 0.0
    %1335 = vmatpush2.msra.mxu0 0.0
    %1336 = vmatprep.subr.mxu0 0.0
    %1337 = vmatpush2.msra.mxu0 0.0
    %1338 = vmatprep.subr.mxu0 0.0
    %1339 = vmatpush2.msra.mxu0 0.0
    %1340 = vmatprep.subr.mxu0 0.0
    %1341 = vmatpush2.msra.mxu0 0.0
    %1342 = vmatprep.subr.mxu0 0.0
    %1343 = vmatpush2.msra.mxu0 0.0
    %1344 = vmatprep.subr.mxu0 0.0
    %1345 = vmatpush2.msra.mxu0 0.0
    %1346 = vmatprep.subr.mxu0 0.0
    %1347 = vmatpush2.msra.mxu0 0.0
    %1348 = vmatprep.subr.mxu0 0.0
    %1349 = vmatpush2.msra.mxu0 0.0
    %1350 = vmatprep.subr.mxu0 0.0
    %1351 = vmatpush2.msra.mxu0 0.0
    %1352 = vmatprep.subr.mxu0 0.0
    %1353 = vmatpush2.msra.mxu0 0.0
    %1354 = vmatprep.subr.mxu0 0.0
    %1355 = vmatpush2.msra.mxu0 0.0
    %1356 = vmatprep.subr.mxu0 0.0
    %1357 = vmatpush2.msra.mxu0 0.0
    %1358 = vmatprep.mubr.f32.mxu0 0.0
    %v1359 = vand.u32 %v1038, 4294901760
    %v1360 = vsub.f32 %v1038, %v1359
    %v1361 = vand.u32 %v1360, 4294901760
    %1362 = vmatmul.mubr.f32.gmra.mxu0 %v1361
    %v1363 = vpop.f32.mrf.mxu0
    %v1364 = vadd.f32 %v1287, %v1363
    %v1365 = vpop.f32.mrf.mxu0
    %1366 = vdwg.mxu0
    %1367 = vmatprep.subr.mxu0 0.0
    %1368 = vmatpush1.msra.mxu0 0.0
    %1369 = vmatprep.subr.mxu0 0.0
    %1370 = vmatpush1.msra.mxu0 0.0
    %1371 = vmatprep.subr.mxu0 0.0
    %1372 = vmatpush1.msra.mxu0 0.0
    %1373 = vmatprep.subr.mxu0 0.0
    %1374 = vmatpush1.msra.mxu0 0.0
    %1375 = vmatprep.subr.mxu0 0.0
    %1376 = vmatpush1.msra.mxu0 0.0
    %1377 = vmatprep.subr.mxu0 0.0
    %1378 = vmatpush1.msra.mxu0 0.0
    %1379 = vmatprep.subr.mxu0 0.0
    %1380 = vmatpush1.msra.mxu0 0.0
    %1381 = vmatprep.subr.mxu0 0.0
    %1382 = vmatpush1.msra.mxu0 0.0
    %1383 = vmatprep.subr.mxu0 0.0
    %1384 = vmatpush1.msra.mxu0 0.0
    %1385 = vmatprep.subr.mxu0 0.0
    %1386 = vmatpush1.msra.mxu0 0.0
    %1387 = vmatprep.subr.mxu0 0.0
    %1388 = vmatpush1.msra.mxu0 0.0
    %1389 = vmatprep.subr.mxu0 0.0
    %1390 = vmatpush1.msra.mxu0 0.0
    %1391 = vmatprep.subr.mxu0 0.0
    %v1392 = vand.u32 %v1036, 4294901760
    %v1393 = vsub.f32 %v1036, %v1392
    %v1394 = vand.u32 %v1393, 4294901760
    %1395 = vmatpush1.msra.mxu0 %v1394
    %1396 = vmatprep.subr.mxu0 0.0
    %v1397 = vand.u32 %v1035, 4294901760
    %v1398 = vsub.f32 %v1035, %v1397
    %v1399 = vand.u32 %v1398, 4294901760
    %1400 = vmatpush1.msra.mxu0 %v1399
    %1401 = vmatprep.subr.mxu0 0.0
    %v1402 = vand.u32 %v1034, 4294901760
    %v1403 = vsub.f32 %v1034, %v1402
    %v1404 = vand.u32 %v1403, 4294901760
    %1405 = vmatpush1.msra.mxu0 %v1404
    %1406 = vmatprep.subr.mxu0 0.0
    %v1407 = vand.u32 %v1033, 4294901760
    %v1408 = vsub.f32 %v1033, %v1407
    %v1409 = vand.u32 %v1408, 4294901760
    %1410 = vmatpush1.msra.mxu0 %v1409
    %1411 = vmatprep.subr.mxu0 0.0
    %1412 = vmatpush2.msra.mxu0 0.0
    %1413 = vmatprep.subr.mxu0 0.0
    %1414 = vmatpush2.msra.mxu0 0.0
    %1415 = vmatprep.subr.mxu0 0.0
    %1416 = vmatpush2.msra.mxu0 0.0
    %1417 = vmatprep.subr.mxu0 0.0
    %1418 = vmatpush2.msra.mxu0 0.0
    %1419 = vmatprep.subr.mxu0 0.0
    %1420 = vmatpush2.msra.mxu0 0.0
    %1421 = vmatprep.subr.mxu0 0.0
    %1422 = vmatpush2.msra.mxu0 0.0
    %1423 = vmatprep.subr.mxu0 0.0
    %1424 = vmatpush2.msra.mxu0 0.0
    %1425 = vmatprep.subr.mxu0 0.0
    %1426 = vmatpush2.msra.mxu0 0.0
    %1427 = vmatprep.subr.mxu0 0.0
    %1428 = vmatpush2.msra.mxu0 0.0
    %1429 = vmatprep.subr.mxu0 0.0
    %1430 = vmatpush2.msra.mxu0 0.0
    %1431 = vmatprep.subr.mxu0 0.0
    %1432 = vmatpush2.msra.mxu0 0.0
    %1433 = vmatprep.subr.mxu0 0.0
    %1434 = vmatpush2.msra.mxu0 0.0
    %1435 = vmatprep.subr.mxu0 0.0
    %1436 = vmatpush2.msra.mxu0 0.0
    %1437 = vmatprep.subr.mxu0 0.0
    %1438 = vmatpush2.msra.mxu0 0.0
    %1439 = vmatprep.subr.mxu0 0.0
    %1440 = vmatpush2.msra.mxu0 0.0
    %1441 = vmatprep.subr.mxu0 0.0
    %1442 = vmatpush2.msra.mxu0 0.0
    %1443 = vmatprep.mubr.f32.mxu0 0.0
    %v1444 = vand.u32 %v1038, 4294901760
    %1445 = vmatmul.mubr.f32.gmra.mxu0 %v1444
    %v1446 = vpop.f32.mrf.mxu0
    %v1447 = vadd.f32 %v1364, %v1446
    %v1448 = vpop.f32.mrf.mxu0
    %1449 = vdwg.mxu0
    %1450 = vmatprep.subr.mxu0 0.0
    %1451 = vmatpush1.msra.mxu0 0.0
    %1452 = vmatprep.subr.mxu0 0.0
    %1453 = vmatpush1.msra.mxu0 0.0
    %1454 = vmatprep.subr.mxu0 0.0
    %1455 = vmatpush1.msra.mxu0 0.0
    %1456 = vmatprep.subr.mxu0 0.0
    %1457 = vmatpush1.msra.mxu0 0.0
    %1458 = vmatprep.subr.mxu0 0.0
    %1459 = vmatpush1.msra.mxu0 0.0
    %1460 = vmatprep.subr.mxu0 0.0
    %1461 = vmatpush1.msra.mxu0 0.0
    %1462 = vmatprep.subr.mxu0 0.0
    %1463 = vmatpush1.msra.mxu0 0.0
    %1464 = vmatprep.subr.mxu0 0.0
    %1465 = vmatpush1.msra.mxu0 0.0
    %1466 = vmatprep.subr.mxu0 0.0
    %1467 = vmatpush1.msra.mxu0 0.0
    %1468 = vmatprep.subr.mxu0 0.0
    %1469 = vmatpush1.msra.mxu0 0.0
    %1470 = vmatprep.subr.mxu0 0.0
    %1471 = vmatpush1.msra.mxu0 0.0
    %1472 = vmatprep.subr.mxu0 0.0
    %1473 = vmatpush1.msra.mxu0 0.0
    %1474 = vmatprep.subr.mxu0 0.0
    %v1475 = vand.u32 %v1036, 4294901760
    %1476 = vmatpush1.msra.mxu0 %v1475
    %1477 = vmatprep.subr.mxu0 0.0
    %v1478 = vand.u32 %v1035, 4294901760
    %1479 = vmatpush1.msra.mxu0 %v1478
    %1480 = vmatprep.subr.mxu0 0.0
    %v1481 = vand.u32 %v1034, 4294901760
    %1482 = vmatpush1.msra.mxu0 %v1481
    %1483 = vmatprep.subr.mxu0 0.0
    %v1484 = vand.u32 %v1033, 4294901760
    %1485 = vmatpush1.msra.mxu0 %v1484
    %1486 = vmatprep.subr.mxu0 0.0
    %1487 = vmatpush2.msra.mxu0 0.0
    %1488 = vmatprep.subr.mxu0 0.0
    %1489 = vmatpush2.msra.mxu0 0.0
    %1490 = vmatprep.subr.mxu0 0.0
    %1491 = vmatpush2.msra.mxu0 0.0
    %1492 = vmatprep.subr.mxu0 0.0
    %1493 = vmatpush2.msra.mxu0 0.0
    %1494 = vmatprep.subr.mxu0 0.0
    %1495 = vmatpush2.msra.mxu0 0.0
    %1496 = vmatprep.subr.mxu0 0.0
    %1497 = vmatpush2.msra.mxu0 0.0
    %1498 = vmatprep.subr.mxu0 0.0
    %1499 = vmatpush2.msra.mxu0 0.0
    %1500 = vmatprep.subr.mxu0 0.0
    %1501 = vmatpush2.msra.mxu0 0.0
    %1502 = vmatprep.subr.mxu0 0.0
    %1503 = vmatpush2.msra.mxu0 0.0
    %1504 = vmatprep.subr.mxu0 0.0
    %1505 = vmatpush2.msra.mxu0 0.0
    %1506 = vmatprep.subr.mxu0 0.0
    %1507 = vmatpush2.msra.mxu0 0.0
    %1508 = vmatprep.subr.mxu0 0.0
    %1509 = vmatpush2.msra.mxu0 0.0
    %1510 = vmatprep.subr.mxu0 0.0
    %1511 = vmatpush2.msra.mxu0 0.0
    %1512 = vmatprep.subr.mxu0 0.0
    %1513 = vmatpush2.msra.mxu0 0.0
    %1514 = vmatprep.subr.mxu0 0.0
    %1515 = vmatpush2.msra.mxu0 0.0
    %1516 = vmatprep.subr.mxu0 0.0
    %1517 = vmatpush2.msra.mxu0 0.0
    %1518 = vmatprep.mubr.f32.mxu0 0.0
    %v1519 = vand.u32 %v1038, 4294901760
    %1520 = vmatmul.mubr.f32.gmra.mxu0 %v1519
    %v1521 = vpop.f32.mrf.mxu0
    %v1522 = vadd.f32 %v1447, %v1521
    %v1523 = vpop.f32.mrf.mxu0
    %1524 = vdwg.mxu0
    %1525 = vmatprep.subr.mxu0 0.0
    %1526 = vmatpush1.msra.mxu0 0.0
    %1527 = vmatprep.subr.mxu0 0.0
    %1528 = vmatpush1.msra.mxu0 0.0
    %1529 = vmatprep.subr.mxu0 0.0
    %1530 = vmatpush1.msra.mxu0 0.0
    %1531 = vmatprep.subr.mxu0 0.0
    %1532 = vmatpush1.msra.mxu0 0.0
    %1533 = vmatprep.subr.mxu0 0.0
    %1534 = vmatpush1.msra.mxu0 0.0
    %1535 = vmatprep.subr.mxu0 0.0
    %1536 = vmatpush1.msra.mxu0 0.0
    %1537 = vmatprep.subr.mxu0 0.0
    %1538 = vmatpush1.msra.mxu0 0.0
    %1539 = vmatprep.subr.mxu0 0.0
    %1540 = vmatpush1.msra.mxu0 0.0
    %1541 = vmatprep.subr.mxu0 0.0
    %1542 = vmatpush1.msra.mxu0 0.0
    %1543 = vmatprep.subr.mxu0 0.0
    %1544 = vmatpush1.msra.mxu0 0.0
    %1545 = vmatprep.subr.mxu0 0.0
    %1546 = vmatpush1.msra.mxu0 0.0
    %1547 = vmatprep.subr.mxu0 0.0
    %1548 = vmatpush1.msra.mxu0 0.0
    %1549 = vmatprep.subr.mxu0 0.0
    %1550 = vmatpush1.msra.mxu0 0.0
    %1551 = vmatprep.subr.mxu0 0.0
    %1552 = vmatpush1.msra.mxu0 0.0
    %1553 = vmatprep.subr.mxu0 0.0
    %v1554 = vand.u32 %v1032, 4294901760
    %1555 = vmatpush1.msra.mxu0 %v1554
    %1556 = vmatprep.subr.mxu0 0.0
    %v1557 = vand.u32 %v1031, 4294901760
    %1558 = vmatpush1.msra.mxu0 %v1557
    %1559 = vmatprep.subr.mxu0 0.0
    %1560 = vmatpush2.msra.mxu0 0.0
    %1561 = vmatprep.subr.mxu0 0.0
    %1562 = vmatpush2.msra.mxu0 0.0
    %1563 = vmatprep.subr.mxu0 0.0
    %1564 = vmatpush2.msra.mxu0 0.0
    %1565 = vmatprep.subr.mxu0 0.0
    %1566 = vmatpush2.msra.mxu0 0.0
    %1567 = vmatprep.subr.mxu0 0.0
    %1568 = vmatpush2.msra.mxu0 0.0
    %1569 = vmatprep.subr.mxu0 0.0
    %1570 = vmatpush2.msra.mxu0 0.0
    %1571 = vmatprep.subr.mxu0 0.0
    %1572 = vmatpush2.msra.mxu0 0.0
    %1573 = vmatprep.subr.mxu0 0.0
    %1574 = vmatpush2.msra.mxu0 0.0
    %1575 = vmatprep.subr.mxu0 0.0
    %1576 = vmatpush2.msra.mxu0 0.0
    %1577 = vmatprep.subr.mxu0 0.0
    %1578 = vmatpush2.msra.mxu0 0.0
    %1579 = vmatprep.subr.mxu0 0.0
    %1580 = vmatpush2.msra.mxu0 0.0
    %1581 = vmatprep.subr.mxu0 0.0
    %1582 = vmatpush2.msra.mxu0 0.0
    %1583 = vmatprep.subr.mxu0 0.0
    %1584 = vmatpush2.msra.mxu0 0.0
    %1585 = vmatprep.subr.mxu0 0.0
    %1586 = vmatpush2.msra.mxu0 0.0
    %1587 = vmatprep.subr.mxu0 0.0
    %1588 = vmatpush2.msra.mxu0 0.0
    %1589 = vmatprep.subr.mxu0 0.0
    %1590 = vmatpush2.msra.mxu0 0.0
    %1591 = vmatprep.mubr.f32.mxu0 0.0
    %v1592 = vand.u32 %v68, 4294901760
    %v1593 = vsub.f32 %v68, %v1592
    %v1594 = vand.u32 %v1593, 4294901760
    %v1595 = vsub.f32 %v1593, %v1594
    %v1596 = vand.u32 %v1595, 4294901760
    %1597 = vmatmul.mubr.f32.gmra.mxu0 %v1596
    %v1598 = vpop.f32.mrf.mxu0
    %v1599 = vadd.f32 %v1522, %v1598
    %v1600 = vpop.f32.mrf.mxu0
    %1601 = vdwg.mxu0
    %1602 = vmatprep.subr.mxu0 0.0
    %1603 = vmatpush1.msra.mxu0 0.0
    %1604 = vmatprep.subr.mxu0 0.0
    %1605 = vmatpush1.msra.mxu0 0.0
    %1606 = vmatprep.subr.mxu0 0.0
    %1607 = vmatpush1.msra.mxu0 0.0
    %1608 = vmatprep.subr.mxu0 0.0
    %1609 = vmatpush1.msra.mxu0 0.0
    %1610 = vmatprep.subr.mxu0 0.0
    %1611 = vmatpush1.msra.mxu0 0.0
    %1612 = vmatprep.subr.mxu0 0.0
    %1613 = vmatpush1.msra.mxu0 0.0
    %1614 = vmatprep.subr.mxu0 0.0
    %1615 = vmatpush1.msra.mxu0 0.0
    %1616 = vmatprep.subr.mxu0 0.0
    %1617 = vmatpush1.msra.mxu0 0.0
    %1618 = vmatprep.subr.mxu0 0.0
    %1619 = vmatpush1.msra.mxu0 0.0
    %1620 = vmatprep.subr.mxu0 0.0
    %1621 = vmatpush1.msra.mxu0 0.0
    %1622 = vmatprep.subr.mxu0 0.0
    %1623 = vmatpush1.msra.mxu0 0.0
    %1624 = vmatprep.subr.mxu0 0.0
    %1625 = vmatpush1.msra.mxu0 0.0
    %1626 = vmatprep.subr.mxu0 0.0
    %1627 = vmatpush1.msra.mxu0 0.0
    %1628 = vmatprep.subr.mxu0 0.0
    %1629 = vmatpush1.msra.mxu0 0.0
    %1630 = vmatprep.subr.mxu0 0.0
    %v1631 = vand.u32 %v1032, 4294901760
    %v1632 = vsub.f32 %v1032, %v1631
    %v1633 = vand.u32 %v1632, 4294901760
    %v1634 = vsub.f32 %v1632, %v1633
    %v1635 = vand.u32 %v1634, 4294901760
    %1636 = vmatpush1.msra.mxu0 %v1635
    %1637 = vmatprep.subr.mxu0 0.0
    %v1638 = vand.u32 %v1031, 4294901760
    %v1639 = vsub.f32 %v1031, %v1638
    %v1640 = vand.u32 %v1639, 4294901760
    %v1641 = vsub.f32 %v1639, %v1640
    %v1642 = vand.u32 %v1641, 4294901760
    %1643 = vmatpush1.msra.mxu0 %v1642
    %1644 = vmatprep.subr.mxu0 0.0
    %1645 = vmatpush2.msra.mxu0 0.0
    %1646 = vmatprep.subr.mxu0 0.0
    %1647 = vmatpush2.msra.mxu0 0.0
    %1648 = vmatprep.subr.mxu0 0.0
    %1649 = vmatpush2.msra.mxu0 0.0
    %1650 = vmatprep.subr.mxu0 0.0
    %1651 = vmatpush2.msra.mxu0 0.0
    %1652 = vmatprep.subr.mxu0 0.0
    %1653 = vmatpush2.msra.mxu0 0.0
    %1654 = vmatprep.subr.mxu0 0.0
    %1655 = vmatpush2.msra.mxu0 0.0
    %1656 = vmatprep.subr.mxu0 0.0
    %1657 = vmatpush2.msra.mxu0 0.0
    %1658 = vmatprep.subr.mxu0 0.0
    %1659 = vmatpush2.msra.mxu0 0.0
    %1660 = vmatprep.subr.mxu0 0.0
    %1661 = vmatpush2.msra.mxu0 0.0
    %1662 = vmatprep.subr.mxu0 0.0
    %1663 = vmatpush2.msra.mxu0 0.0
    %1664 = vmatprep.subr.mxu0 0.0
    %1665 = vmatpush2.msra.mxu0 0.0
    %1666 = vmatprep.subr.mxu0 0.0
    %1667 = vmatpush2.msra.mxu0 0.0
    %1668 = vmatprep.subr.mxu0 0.0
    %1669 = vmatpush2.msra.mxu0 0.0
    %1670 = vmatprep.subr.mxu0 0.0
    %1671 = vmatpush2.msra.mxu0 0.0
    %1672 = vmatprep.subr.mxu0 0.0
    %1673 = vmatpush2.msra.mxu0 0.0
    %1674 = vmatprep.subr.mxu0 0.0
    %1675 = vmatpush2.msra.mxu0 0.0
    %1676 = vmatprep.mubr.f32.mxu0 0.0
    %v1677 = vand.u32 %v68, 4294901760
    %1678 = vmatmul.mubr.f32.gmra.mxu0 %v1677
    %v1679 = vpop.f32.mrf.mxu0
    %v1680 = vadd.f32 %v1599, %v1679
    %v1681 = vpop.f32.mrf.mxu0
    %1682 = vdwg.mxu0
    %1683 = vmatprep.subr.mxu0 0.0
    %1684 = vmatpush1.msra.mxu0 0.0
    %1685 = vmatprep.subr.mxu0 0.0
    %1686 = vmatpush1.msra.mxu0 0.0
    %1687 = vmatprep.subr.mxu0 0.0
    %1688 = vmatpush1.msra.mxu0 0.0
    %1689 = vmatprep.subr.mxu0 0.0
    %1690 = vmatpush1.msra.mxu0 0.0
    %1691 = vmatprep.subr.mxu0 0.0
    %1692 = vmatpush1.msra.mxu0 0.0
    %1693 = vmatprep.subr.mxu0 0.0
    %1694 = vmatpush1.msra.mxu0 0.0
    %1695 = vmatprep.subr.mxu0 0.0
    %1696 = vmatpush1.msra.mxu0 0.0
    %1697 = vmatprep.subr.mxu0 0.0
    %1698 = vmatpush1.msra.mxu0 0.0
    %1699 = vmatprep.subr.mxu0 0.0
    %1700 = vmatpush1.msra.mxu0 0.0
    %1701 = vmatprep.subr.mxu0 0.0
    %1702 = vmatpush1.msra.mxu0 0.0
    %1703 = vmatprep.subr.mxu0 0.0
    %1704 = vmatpush1.msra.mxu0 0.0
    %1705 = vmatprep.subr.mxu0 0.0
    %1706 = vmatpush1.msra.mxu0 0.0
    %1707 = vmatprep.subr.mxu0 0.0
    %1708 = vmatpush1.msra.mxu0 0.0
    %1709 = vmatprep.subr.mxu0 0.0
    %1710 = vmatpush1.msra.mxu0 0.0
    %1711 = vmatprep.subr.mxu0 0.0
    %v1712 = vand.u32 %v1032, 4294901760
    %v1713 = vsub.f32 %v1032, %v1712
    %1714 = vmatpush1.msra.mxu0 %v1713
    %1715 = vmatprep.subr.mxu0 0.0
    %v1716 = vand.u32 %v1031, 4294901760
    %v1717 = vsub.f32 %v1031, %v1716
    %1718 = vmatpush1.msra.mxu0 %v1717
    %1719 = vmatprep.subr.mxu0 0.0
    %1720 = vmatpush2.msra.mxu0 0.0
    %1721 = vmatprep.subr.mxu0 0.0
    %1722 = vmatpush2.msra.mxu0 0.0
    %1723 = vmatprep.subr.mxu0 0.0
    %1724 = vmatpush2.msra.mxu0 0.0
    %1725 = vmatprep.subr.mxu0 0.0
    %1726 = vmatpush2.msra.mxu0 0.0
    %1727 = vmatprep.subr.mxu0 0.0
    %1728 = vmatpush2.msra.mxu0 0.0
    %1729 = vmatprep.subr.mxu0 0.0
    %1730 = vmatpush2.msra.mxu0 0.0
    %1731 = vmatprep.subr.mxu0 0.0
    %1732 = vmatpush2.msra.mxu0 0.0
    %1733 = vmatprep.subr.mxu0 0.0
    %1734 = vmatpush2.msra.mxu0 0.0
    %1735 = vmatprep.subr.mxu0 0.0
    %1736 = vmatpush2.msra.mxu0 0.0
    %1737 = vmatprep.subr.mxu0 0.0
    %1738 = vmatpush2.msra.mxu0 0.0
    %1739 = vmatprep.subr.mxu0 0.0
    %1740 = vmatpush2.msra.mxu0 0.0
    %1741 = vmatprep.subr.mxu0 0.0
    %1742 = vmatpush2.msra.mxu0 0.0
    %1743 = vmatprep.subr.mxu0 0.0
    %1744 = vmatpush2.msra.mxu0 0.0
    %1745 = vmatprep.subr.mxu0 0.0
    %1746 = vmatpush2.msra.mxu0 0.0
    %1747 = vmatprep.subr.mxu0 0.0
    %1748 = vmatpush2.msra.mxu0 0.0
    %1749 = vmatprep.subr.mxu0 0.0
    %1750 = vmatpush2.msra.mxu0 0.0
    %1751 = vmatprep.mubr.f32.mxu0 0.0
    %v1752 = vand.u32 %v68, 4294901760
    %v1753 = vsub.f32 %v68, %v1752
    %1754 = vmatmul.mubr.f32.gmra.mxu0 %v1753
    %v1755 = vpop.f32.mrf.mxu0
    %v1756 = vadd.f32 %v1680, %v1755
    %v1757 = vpop.f32.mrf.mxu0
    %1758 = vdwg.mxu0
    %1759 = vmatprep.subr.mxu0 0.0
    %1760 = vmatpush1.msra.mxu0 0.0
    %1761 = vmatprep.subr.mxu0 0.0
    %1762 = vmatpush1.msra.mxu0 0.0
    %1763 = vmatprep.subr.mxu0 0.0
    %1764 = vmatpush1.msra.mxu0 0.0
    %1765 = vmatprep.subr.mxu0 0.0
    %1766 = vmatpush1.msra.mxu0 0.0
    %1767 = vmatprep.subr.mxu0 0.0
    %1768 = vmatpush1.msra.mxu0 0.0
    %1769 = vmatprep.subr.mxu0 0.0
    %1770 = vmatpush1.msra.mxu0 0.0
    %1771 = vmatprep.subr.mxu0 0.0
    %1772 = vmatpush1.msra.mxu0 0.0
    %1773 = vmatprep.subr.mxu0 0.0
    %1774 = vmatpush1.msra.mxu0 0.0
    %1775 = vmatprep.subr.mxu0 0.0
    %1776 = vmatpush1.msra.mxu0 0.0
    %1777 = vmatprep.subr.mxu0 0.0
    %1778 = vmatpush1.msra.mxu0 0.0
    %1779 = vmatprep.subr.mxu0 0.0
    %1780 = vmatpush1.msra.mxu0 0.0
    %1781 = vmatprep.subr.mxu0 0.0
    %1782 = vmatpush1.msra.mxu0 0.0
    %1783 = vmatprep.subr.mxu0 0.0
    %1784 = vmatpush1.msra.mxu0 0.0
    %1785 = vmatprep.subr.mxu0 0.0
    %1786 = vmatpush1.msra.mxu0 0.0
    %1787 = vmatprep.subr.mxu0 0.0
    %v1788 = vand.u32 %v1032, 4294901760
    %1789 = vmatpush1.msra.mxu0 %v1788
    %1790 = vmatprep.subr.mxu0 0.0
    %v1791 = vand.u32 %v1031, 4294901760
    %1792 = vmatpush1.msra.mxu0 %v1791
    %1793 = vmatprep.subr.mxu0 0.0
    %1794 = vmatpush2.msra.mxu0 0.0
    %1795 = vmatprep.subr.mxu0 0.0
    %1796 = vmatpush2.msra.mxu0 0.0
    %1797 = vmatprep.subr.mxu0 0.0
    %1798 = vmatpush2.msra.mxu0 0.0
    %1799 = vmatprep.subr.mxu0 0.0
    %1800 = vmatpush2.msra.mxu0 0.0
    %1801 = vmatprep.subr.mxu0 0.0
    %1802 = vmatpush2.msra.mxu0 0.0
    %1803 = vmatprep.subr.mxu0 0.0
    %1804 = vmatpush2.msra.mxu0 0.0
    %1805 = vmatprep.subr.mxu0 0.0
    %1806 = vmatpush2.msra.mxu0 0.0
    %1807 = vmatprep.subr.mxu0 0.0
    %1808 = vmatpush2.msra.mxu0 0.0
    %1809 = vmatprep.subr.mxu0 0.0
    %1810 = vmatpush2.msra.mxu0 0.0
    %1811 = vmatprep.subr.mxu0 0.0
    %1812 = vmatpush2.msra.mxu0 0.0
    %1813 = vmatprep.subr.mxu0 0.0
    %1814 = vmatpush2.msra.mxu0 0.0
    %1815 = vmatprep.subr.mxu0 0.0
    %1816 = vmatpush2.msra.mxu0 0.0
    %1817 = vmatprep.subr.mxu0 0.0
    %1818 = vmatpush2.msra.mxu0 0.0
    %1819 = vmatprep.subr.mxu0 0.0
    %1820 = vmatpush2.msra.mxu0 0.0
    %1821 = vmatprep.subr.mxu0 0.0
    %1822 = vmatpush2.msra.mxu0 0.0
    %1823 = vmatprep.subr.mxu0 0.0
    %1824 = vmatpush2.msra.mxu0 0.0
    %1825 = vmatprep.mubr.f32.mxu0 0.0
    %v1826 = vand.u32 %v68, 4294901760
    %v1827 = vsub.f32 %v68, %v1826
    %v1828 = vand.u32 %v1827, 4294901760
    %1829 = vmatmul.mubr.f32.gmra.mxu0 %v1828
    %v1830 = vpop.f32.mrf.mxu0
    %v1831 = vadd.f32 %v1756, %v1830
    %v1832 = vpop.f32.mrf.mxu0
    %1833 = vdwg.mxu0
    %1834 = vmatprep.subr.mxu0 0.0
    %1835 = vmatpush1.msra.mxu0 0.0
    %1836 = vmatprep.subr.mxu0 0.0
    %1837 = vmatpush1.msra.mxu0 0.0
    %1838 = vmatprep.subr.mxu0 0.0
    %1839 = vmatpush1.msra.mxu0 0.0
    %1840 = vmatprep.subr.mxu0 0.0
    %1841 = vmatpush1.msra.mxu0 0.0
    %1842 = vmatprep.subr.mxu0 0.0
    %1843 = vmatpush1.msra.mxu0 0.0
    %1844 = vmatprep.subr.mxu0 0.0
    %1845 = vmatpush1.msra.mxu0 0.0
    %1846 = vmatprep.subr.mxu0 0.0
    %1847 = vmatpush1.msra.mxu0 0.0
    %1848 = vmatprep.subr.mxu0 0.0
    %1849 = vmatpush1.msra.mxu0 0.0
    %1850 = vmatprep.subr.mxu0 0.0
    %1851 = vmatpush1.msra.mxu0 0.0
    %1852 = vmatprep.subr.mxu0 0.0
    %1853 = vmatpush1.msra.mxu0 0.0
    %1854 = vmatprep.subr.mxu0 0.0
    %1855 = vmatpush1.msra.mxu0 0.0
    %1856 = vmatprep.subr.mxu0 0.0
    %1857 = vmatpush1.msra.mxu0 0.0
    %1858 = vmatprep.subr.mxu0 0.0
    %1859 = vmatpush1.msra.mxu0 0.0
    %1860 = vmatprep.subr.mxu0 0.0
    %1861 = vmatpush1.msra.mxu0 0.0
    %1862 = vmatprep.subr.mxu0 0.0
    %v1863 = vand.u32 %v1032, 4294901760
    %v1864 = vsub.f32 %v1032, %v1863
    %v1865 = vand.u32 %v1864, 4294901760
    %1866 = vmatpush1.msra.mxu0 %v1865
    %1867 = vmatprep.subr.mxu0 0.0
    %v1868 = vand.u32 %v1031, 4294901760
    %v1869 = vsub.f32 %v1031, %v1868
    %v1870 = vand.u32 %v1869, 4294901760
    %1871 = vmatpush1.msra.mxu0 %v1870
    %1872 = vmatprep.subr.mxu0 0.0
    %1873 = vmatpush2.msra.mxu0 0.0
    %1874 = vmatprep.subr.mxu0 0.0
    %1875 = vmatpush2.msra.mxu0 0.0
    %1876 = vmatprep.subr.mxu0 0.0
    %1877 = vmatpush2.msra.mxu0 0.0
    %1878 = vmatprep.subr.mxu0 0.0
    %1879 = vmatpush2.msra.mxu0 0.0
    %1880 = vmatprep.subr.mxu0 0.0
    %1881 = vmatpush2.msra.mxu0 0.0
    %1882 = vmatprep.subr.mxu0 0.0
    %1883 = vmatpush2.msra.mxu0 0.0
    %1884 = vmatprep.subr.mxu0 0.0
    %1885 = vmatpush2.msra.mxu0 0.0
    %1886 = vmatprep.subr.mxu0 0.0
    %1887 = vmatpush2.msra.mxu0 0.0
    %1888 = vmatprep.subr.mxu0 0.0
    %1889 = vmatpush2.msra.mxu0 0.0
    %1890 = vmatprep.subr.mxu0 0.0
    %1891 = vmatpush2.msra.mxu0 0.0
    %1892 = vmatprep.subr.mxu0 0.0
    %1893 = vmatpush2.msra.mxu0 0.0
    %1894 = vmatprep.subr.mxu0 0.0
    %1895 = vmatpush2.msra.mxu0 0.0
    %1896 = vmatprep.subr.mxu0 0.0
    %1897 = vmatpush2.msra.mxu0 0.0
    %1898 = vmatprep.subr.mxu0 0.0
    %1899 = vmatpush2.msra.mxu0 0.0
    %1900 = vmatprep.subr.mxu0 0.0
    %1901 = vmatpush2.msra.mxu0 0.0
    %1902 = vmatprep.subr.mxu0 0.0
    %1903 = vmatpush2.msra.mxu0 0.0
    %1904 = vmatprep.mubr.f32.mxu0 0.0
    %v1905 = vand.u32 %v68, 4294901760
    %1906 = vmatmul.mubr.f32.gmra.mxu0 %v1905
    %v1907 = vpop.f32.mrf.mxu0
    %v1908 = vadd.f32 %v1831, %v1907
    %v1909 = vpop.f32.mrf.mxu0
    %1910 = vdwg.mxu0
    %1911 = vmatprep.subr.mxu0 0.0
    %1912 = vmatpush1.msra.mxu0 0.0
    %1913 = vmatprep.subr.mxu0 0.0
    %1914 = vmatpush1.msra.mxu0 0.0
    %1915 = vmatprep.subr.mxu0 0.0
    %1916 = vmatpush1.msra.mxu0 0.0
    %1917 = vmatprep.subr.mxu0 0.0
    %1918 = vmatpush1.msra.mxu0 0.0
    %1919 = vmatprep.subr.mxu0 0.0
    %1920 = vmatpush1.msra.mxu0 0.0
    %1921 = vmatprep.subr.mxu0 0.0
    %1922 = vmatpush1.msra.mxu0 0.0
    %1923 = vmatprep.subr.mxu0 0.0
    %1924 = vmatpush1.msra.mxu0 0.0
    %1925 = vmatprep.subr.mxu0 0.0
    %1926 = vmatpush1.msra.mxu0 0.0
    %1927 = vmatprep.subr.mxu0 0.0
    %1928 = vmatpush1.msra.mxu0 0.0
    %1929 = vmatprep.subr.mxu0 0.0
    %1930 = vmatpush1.msra.mxu0 0.0
    %1931 = vmatprep.subr.mxu0 0.0
    %1932 = vmatpush1.msra.mxu0 0.0
    %1933 = vmatprep.subr.mxu0 0.0
    %1934 = vmatpush1.msra.mxu0 0.0
    %1935 = vmatprep.subr.mxu0 0.0
    %1936 = vmatpush1.msra.mxu0 0.0
    %1937 = vmatprep.subr.mxu0 0.0
    %1938 = vmatpush1.msra.mxu0 0.0
    %1939 = vmatprep.subr.mxu0 0.0
    %v1940 = vand.u32 %v1032, 4294901760
    %1941 = vmatpush1.msra.mxu0 %v1940
    %1942 = vmatprep.subr.mxu0 0.0
    %v1943 = vand.u32 %v1031, 4294901760
    %1944 = vmatpush1.msra.mxu0 %v1943
    %1945 = vmatprep.subr.mxu0 0.0
    %1946 = vmatpush2.msra.mxu0 0.0
    %1947 = vmatprep.subr.mxu0 0.0
    %1948 = vmatpush2.msra.mxu0 0.0
    %1949 = vmatprep.subr.mxu0 0.0
    %1950 = vmatpush2.msra.mxu0 0.0
    %1951 = vmatprep.subr.mxu0 0.0
    %1952 = vmatpush2.msra.mxu0 0.0
    %1953 = vmatprep.subr.mxu0 0.0
    %1954 = vmatpush2.msra.mxu0 0.0
    %1955 = vmatprep.subr.mxu0 0.0
    %1956 = vmatpush2.msra.mxu0 0.0
    %1957 = vmatprep.subr.mxu0 0.0
    %1958 = vmatpush2.msra.mxu0 0.0
    %1959 = vmatprep.subr.mxu0 0.0
    %1960 = vmatpush2.msra.mxu0 0.0
    %1961 = vmatprep.subr.mxu0 0.0
    %1962 = vmatpush2.msra.mxu0 0.0
    %1963 = vmatprep.subr.mxu0 0.0
    %1964 = vmatpush2.msra.mxu0 0.0
    %1965 = vmatprep.subr.mxu0 0.0
    %1966 = vmatpush2.msra.mxu0 0.0
    %1967 = vmatprep.subr.mxu0 0.0
    %1968 = vmatpush2.msra.mxu0 0.0
    %1969 = vmatprep.subr.mxu0 0.0
    %1970 = vmatpush2.msra.mxu0 0.0
    %1971 = vmatprep.subr.mxu0 0.0
    %1972 = vmatpush2.msra.mxu0 0.0
    %1973 = vmatprep.subr.mxu0 0.0
    %1974 = vmatpush2.msra.mxu0 0.0
    %1975 = vmatprep.subr.mxu0 0.0
    %1976 = vmatpush2.msra.mxu0 0.0
    %1977 = vmatprep.mubr.f32.mxu0 0.0
    %v1978 = vand.u32 %v68, 4294901760
    %1979 = vmatmul.mubr.f32.gmra.mxu0 %v1978
    %v1980 = vpop.f32.mrf.mxu0
    %v1981 = vadd.f32 %v1908, %v1980
    %v1982 = vpop.f32.mrf.mxu0
    %1983 = vdwg.mxu0
    %v1984 = vld [vmem:[%s7] sm:$0x1]
    %v1986 = vlaneseq
    %v1987 = vshrl.u32 %v1986, 7
    %v1988 = vsub.s32 0, %v1987
    %v1989 = vrot.slane %v1984, %v1988
    %v1991 = vadd.f32 %v1981, %v1989
    %vm1992 = vcmask 97280
    %1993 = vst.msk [vmem:[#allocation7] sm:$0xff] %vm1992, %v1991
    // Predicated region
    $region42: #{tpu_custom_call.1} parent=1 // pred_check
      _
    $region43: #{tpu_custom_call.1} parent=1 // pred_check_branch
      %1995 = sbr.rel (0) target = $region45
    $region44: #{tpu_custom_call.1} parent=1 // pred_region
      %s1997 = ssub.s32 128, 128
      %1998 = vsyncadd [#allocation4], %s1997
      %s2000 = sshll.u32 [#allocation7], 4
      %s2001 = int_to_ptr.vmem [resolvable:$true] %s2000
      %2003 = dma.vmem_to_hbm [thread:$0]  %s2001, 128, %s8, [#allocation4]
    $region45: #{tpu_custom_call.1} parent=1 // pred_fallthru
      _
    // Predicated region
    $region46: #{tpu_custom_call.1} parent=1 // pred_check
      _
    $region47: #{tpu_custom_call.1} parent=1 // pred_check_branch
      %2005 = sbr.rel (0) target = $region49
    $region48: #{tpu_custom_call.1} parent=1 // pred_region
      %2006 = dma.done [#allocation4], 128
    $region49: #{tpu_custom_call.1} parent=1 // pred_fallthru
      _
    %2007 = vsyncpa [#allocation3], 1
    %2008 = vsyncpa [#allocation6], 1
    %2009 = vsyncpa [#allocation4], 1

</llo_original>
